<compile_context>
chip_gen: v5e
topology: v5e:2x2
jax: 0.10.0
libtpu: 0.0.40
codegen_flags: <defaults>
</compile_context>

<pallas_src>
import jax
import jax.numpy as jnp
from jax import lax
from jax.experimental import pallas as pl
from jax.experimental.pallas import tpu as pltpu

LANE = 128


def _round_up(x, m):
    return (x + m - 1) // m * m


def _vmem_specs(n):
    return [pl.BlockSpec(memory_space=pltpu.MemorySpace.VMEM) for _ in range(n)]


# ----------------------------------------------------------------------------
# 1. LSTM question encoder kernel (single invocation, unrolled time loop)
# ----------------------------------------------------------------------------
def lstm_kernel(xw_ref, whh_ref, h_out_ref):
    """xw_ref: (T, B, 4H) = precomputed x_t @ W_ih + b; whh_ref: (H, 4H)."""
    T = xw_ref.shape[0]
    B, H = h_out_ref.shape
    whh = whh_ref[...]  # hoisted out of the recurrence

    def step(t, carry):
        h, c = carry
        # only the recurrent matmul stays on the serial critical path
        gates = xw_ref[t] + jnp.dot(h, whh, preferred_element_type=jnp.float32)
        # PyTorch gate order: i, f, g, o  (4H == 128 lanes exactly)
        i = jax.nn.sigmoid(gates[:, 0 * H:1 * H])
        f = jax.nn.sigmoid(gates[:, 1 * H:2 * H])
        g = jnp.tanh(gates[:, 2 * H:3 * H])
        o = jax.nn.sigmoid(gates[:, 3 * H:4 * H])
        c = f * c + i * g
        h = o * jnp.tanh(c)
        return (h, c)

    h0 = jnp.zeros((B, H), jnp.float32)
    c0 = jnp.zeros((B, H), jnp.float32)
    h_final, _ = lax.fori_loop(0, T, step, (h0, c0), unroll=True)
    h_out_ref[...] = h_final


def run_lstm(xw_tbg, w_hh):
    """xw_tbg: (T, B, 4H) pre-projected inputs -> final hidden state (B, H)."""
    T, B, G = xw_tbg.shape
    H = w_hh.shape[0]
    return pl.pallas_call(
        lstm_kernel,
        out_shape=jax.ShapeDtypeStruct((B, H), jnp.float32),
        in_specs=_vmem_specs(2),
        out_specs=pl.BlockSpec(memory_space=pltpu.MemorySpace.VMEM),
    )(xw_tbg, w_hh)


# ----------------------------------------------------------------------------
# 2. FiLM block kernel: conv (one im2col matmul over all batch rows) +
#    FiLM linear + modulation + ReLU, all lane-dense (C padded to 128)
# ----------------------------------------------------------------------------
def film_conv_kernel(p_ref, w_ref, b_ref, txt_ref, fw_ref, fb_ref, o_ref):
    B, OHW, C = o_ref.shape
    KD = w_ref.shape[0]
    # FiLM parameters for all batch elements at once: (B, 2C); C is 128-padded
    gb = (jnp.dot(txt_ref[...], fw_ref[...], preferred_element_type=jnp.float32)
          + fb_ref[...])
    gamma = gb[:, :C].reshape(B, 1, C)   # split at a 128-lane boundary
    beta = gb[:, C:].reshape(B, 1, C)
    # Convolution as a single matmul: (B*OHW, KD) @ (KD, C)
    p = p_ref[...].reshape(B * OHW, KD)  # leading-dim merge: no relayout
    y = jnp.dot(p, w_ref[...], preferred_element_type=jnp.float32) + b_ref[...]
    y = gamma * y.reshape(B, OHW, C) + beta
    o_ref[...] = jnp.maximum(y, 0.0).astype(o_ref.dtype)


def im2col(x_nhwc, k, stride, pad):
    """x: (B, H, W, C) -> patches (B, OH*OW, k*k*C), plus (OH, OW). XLA glue."""
    # TODO(synk): for large frames, build patches inside the kernel to avoid the
    # k^2 HBM duplication; negligible at these 16x16 shapes.
    B, H, W, C = x_nhwc.shape
    xp = jnp.pad(x_nhwc, ((0, 0), (pad, pad), (pad, pad), (0, 0)))
    OH = (H + 2 * pad - k) // stride + 1
    OW = (W + 2 * pad - k) // stride + 1
    cols = []
    for ki in range(k):
        for kj in range(k):
            cols.append(xp[:, ki:ki + stride * OH:stride,
                           kj:kj + stride * OW:stride, :])
    p = jnp.stack(cols, axis=3)                      # (B, OH, OW, k*k, C)
    return p.reshape(B, OH * OW, k * k * C), OH, OW


def run_film_block(x_nhwc, txt, blk, k, stride, pad):
    B = x_nhwc.shape[0]
    conv_w, conv_b = blk["conv_w"], blk["conv_b"]
    film_w, film_b = blk["film_w"], blk["film_b"]
    KD_pad, C_pad = conv_w.shape
    patches, OH, OW = im2col(x_nhwc, k, stride, pad)
    KD = patches.shape[-1]
    if KD != KD_pad:                                  # zero-pad contraction dim
        patches = jnp.pad(patches, ((0, 0), (0, 0), (0, KD_pad - KD)))
    OHW = OH * OW
    out = pl.pallas_call(
        film_conv_kernel,
        out_shape=jax.ShapeDtypeStruct((B, OHW, C_pad), jnp.float32),
        in_specs=_vmem_specs(6),
        out_specs=pl.BlockSpec(memory_space=pltpu.MemorySpace.VMEM),
        compiler_params=pltpu.CompilerParams(vmem_limit_bytes=32 * 1024 * 1024),
    )(patches, conv_w, conv_b, txt, film_w, film_b)
    # TODO(synk): at large OHW, tile OHW with a pipelined "parallel" grid axis
    # (v7x second TensorCore / 64 MiB VMEM); one whole-array block is optimal here.
    return out.reshape(B, OH, OW, C_pad)


# ----------------------------------------------------------------------------
# 3. Head kernel: (vis ++ txt) -> Linear+ReLU -> Linear, concat folded into
#    split first-layer weights, fused in one kernel
# ----------------------------------------------------------------------------
def head_kernel(vis_ref, txt_ref, wv_ref, wt_ref, b1_ref, w2_ref, b2_ref, o_ref):
    h = (jnp.dot(vis_ref[...], wv_ref[...], preferred_element_type=jnp.float32)
         + jnp.dot(txt_ref[...], wt_ref[...], preferred_element_type=jnp.float32)
         + b1_ref[...])
    h = jnp.maximum(h, 0.0)
    o_ref[...] = (jnp.dot(h, w2_ref[...], preferred_element_type=jnp.float32)
                  + b2_ref[...]).astype(o_ref.dtype)


def run_head(vis, txt, wv, wt, b1, w2, b2):
    B = vis.shape[0]
    out_size = w2.shape[-1]
    return pl.pallas_call(
        head_kernel,
        out_shape=jax.ShapeDtypeStruct((B, out_size), jnp.float32),
        in_specs=_vmem_specs(7),
        out_specs=pl.BlockSpec(memory_space=pltpu.MemorySpace.VMEM),
    )(vis, txt, wv, wt, b1, w2, b2)


# ----------------------------------------------------------------------------
# Full FiLM2D forward
# ----------------------------------------------------------------------------
def film2d_forward(params, simulations_nchw, questions, cfg):
    # --- process_question: embed + LSTM, take final hidden state ------------
    # Fold Embedding + LSTM input projection: emb[q] @ W_ih == (emb @ W_ih)[q].
    # TODO(synk): PyTorch nn.LSTM has b_ih + b_hh; b_lstm here is their sum.
    proj = (jnp.dot(params["embedding"], params["w_ih"],
                    preferred_element_type=jnp.float32)
            + params["b_lstm"])                                  # (V, 4H)
    xw = jnp.transpose(jnp.take(proj, questions, axis=0), (1, 0, 2))  # (T, B, 4H)
    txt = run_lstm(xw, params["w_hh"])                           # (B, H)

    # --- process_simulation: FiLM conv blocks (NCHW -> NHWC once) -----------
    x = jnp.transpose(simulations_nchw, (0, 2, 3, 1))            # NHWC
    for blk in params["film_blocks"]:
        x = run_film_block(x, txt, blk, cfg["kernel_size"], cfg["stride"],
                           cfg["padding"])

    # --- flatten(vis) ++ txt -> MLP -> Linear (concat folded into split W1) --
    B = x.shape[0]
    vis = x.reshape(B, -1)
    return run_head(vis, txt, params["mlp_w_vis"], params["mlp_w_txt"],
                    params["mlp_b"], params["lin_w"], params["lin_b"])


# ----------------------------------------------------------------------------
# Deterministic parameter construction (real weights embedded in zero padding
# so the padded forward is exactly equal to the unpadded model)
# ----------------------------------------------------------------------------
def make_params(key, cfg):
    ks = jax.random.split(key, 12)
    V, E, H = cfg["vocab_size"], cfg["embed_size"], cfg["hidden_size"]
    k, stride, pad = cfg["kernel_size"], cfg["stride"], cfg["padding"]
    size = cfg["frame_size"]

    def init(kk, shape, scale=0.1):
        return (scale * jax.random.normal(kk, shape)).astype(jnp.float32)

    params = {
        "embedding": init(ks[0], (V, E)),
        "w_ih": init(ks[1], (E, 4 * H)),
        "w_hh": init(ks[2], (H, 4 * H)),
        "b_lstm": init(ks[3], (1, 4 * H)),   # combined b_ih + b_hh
    }

    blocks = []
    in_real, in_pad = 3, 3
    bkeys = jax.random.split(ks[4], cfg["num_layers"] * 4)
    for i in range(cfg["num_layers"]):
        out_real = (2 ** i) * cfg["num_channels"]
        out_pad = _round_up(out_real, LANE)          # lane-dense channel dim
        kd = k * k * in_pad
        kd_pad = _round_up(kd, LANE)                 # lane/sublane-dense KD

        # conv weight in im2col layout (k*k*Cin_pad, Cout_pad); real values in
        # the first in_real input channels / out_real output channels.
        w = jnp.zeros((k, k, in_pad, out_pad), jnp.float32)
        w = w.at[:, :, :in_real, :out_real].set(
            init(bkeys[4 * i + 0], (k, k, in_real, out_real)))
        w = jnp.pad(w.reshape(kd, out_pad), ((0, kd_pad - kd), (0, 0)))

        cb = jnp.zeros((1, out_pad), jnp.float32).at[:, :out_real].set(
            init(bkeys[4 * i + 1], (1, out_real)))

        fw_real = init(bkeys[4 * i + 2], (H, 2 * out_real))
        fw = jnp.zeros((H, 2 * out_pad), jnp.float32)
        fw = fw.at[:, :out_real].set(fw_real[:, :out_real])                 # gamma
        fw = fw.at[:, out_pad:out_pad + out_real].set(fw_real[:, out_real:])  # beta
        fb_real = init(bkeys[4 * i + 3], (1, 2 * out_real))
        fb = jnp.zeros((1, 2 * out_pad), jnp.float32)
        fb = fb.at[:, :out_real].set(fb_real[:, :out_real])
        fb = fb.at[:, out_pad:out_pad + out_real].set(fb_real[:, out_real:])

        blocks.append({"conv_w": w, "conv_b": cb, "film_w": fw, "film_b": fb})
        size = (size + 2 * pad - k) // stride + 1
        in_real, in_pad = out_real, out_pad
    params["film_blocks"] = blocks

    # TODO(synk): class sets NUM_VIDEO_FRAMES=0 (vis_features would be 0) yet
    # forward concatenates flatten(vis); we size the MLP for the actual vis
    # features (single frame) so the forward graph is runnable.
    mlp_hidden = cfg["mlp_hidden"]
    wv = jnp.zeros((size, size, in_pad, mlp_hidden), jnp.float32)
    wv = wv.at[:, :, :in_real, :].set(
        init(ks[5], (size, size, in_real, mlp_hidden)))
    params["mlp_w_vis"] = wv.reshape(size * size * in_pad, mlp_hidden)
    params["mlp_w_txt"] = init(ks[6], (H, mlp_hidden))
    params["mlp_b"] = init(ks[7], (1, mlp_hidden))
    params["lin_w"] = init(ks[8], (mlp_hidden, cfg["output_size"]))
    params["lin_b"] = init(ks[9], (1, cfg["output_size"]))
    return params


if __name__ == "__main__":
    cfg = dict(
        vocab_size=32, embed_size=32, hidden_size=32,   # question encoder
        frame_size=16, num_layers=2, num_channels=4,    # frame encoder
        kernel_size=3, stride=2, padding=1,
        mlp_hidden=32, output_size=8,
    )
    B, T = 2, 8

    key = jax.random.PRNGKey(0)
    k_par, k_sim, k_q = jax.random.split(key, 3)

    params = make_params(k_par, cfg)
    simulations = jax.random.normal(
        k_sim, (B, 3, cfg["frame_size"], cfg["frame_size"]),
        dtype=jnp.float32)                              # NCHW like torch
    questions = jax.random.randint(k_q, (B, T), 0, cfg["vocab_size"],
                                   dtype=jnp.int32)

    fwd = jax.jit(lambda p, s, q: film2d_forward(p, s, q, cfg))
    out = jax.block_until_ready(fwd(params, simulations, questions))
    assert out.shape == (B, cfg["output_size"])
    assert bool(jnp.all(jnp.isfinite(out)))
    print("KERNEL_OK")
</pallas_src>

<mosaic_0001>
module attributes {stable_mosaic.version = 11 : i64} {
  func.func @lstm_kernel(%arg0: memref<8x2x128xf32, #tpu.memory_space<vmem>>, %arg1: memref<32x128xf32, #tpu.memory_space<vmem>>, %arg2: memref<2x32xf32, #tpu.memory_space<vmem>>) attributes {dimension_semantics = [], scalar_prefetch = 0 : i64, scratch_operands = 0 : i64, tpu.core_type = #tpu.core_type<tc>} {
    %c0 = arith.constant 0 : index
    %c0_0 = arith.constant 0 : index
    %0 = vector.load %arg1[%c0, %c0_0] : memref<32x128xf32, #tpu.memory_space<vmem>>, vector<32x128xf32>
    %cst = arith.constant 0.000000e+00 : f32
    %1 = vector.broadcast %cst : f32 to vector<2x32xf32>
    %cst_1 = arith.constant 0.000000e+00 : f32
    %2 = vector.broadcast %cst_1 : f32 to vector<2x32xf32>
    %c0_i32 = arith.constant 0 : i32
    %3 = arith.index_cast %c0_i32 : i32 to index
    %c0_2 = arith.constant 0 : index
    %c0_3 = arith.constant 0 : index
    %4 = vector.load %arg0[%3, %c0_2, %c0_3] : memref<8x2x128xf32, #tpu.memory_space<vmem>>, vector<1x2x128xf32>
    %5 = vector.shape_cast %4 : vector<1x2x128xf32> to vector<2x128xf32>
    %cst_4 = arith.constant dense<0.000000e+00> : vector<2x128xf32>
    %6 = tpu.matmul %1, %0, %cst_4 {dimension_numbers = #tpu.dot_dimension_numbers<[1], [0], [0], [1], [0, 0, 1, 1], [], []>} : vector<2x32xf32>, vector<32x128xf32>, vector<2x128xf32> -> vector<2x128xf32>
    %7 = arith.addf %5, %6 : vector<2x128xf32>
    %8 = vector.extract_strided_slice %7 {offsets = [0, 0], sizes = [2, 32], strides = [1, 1]} : vector<2x128xf32> to vector<2x32xf32>
    %9 = arith.negf %8 : vector<2x32xf32>
    %10 = math.exp %9 : vector<2x32xf32>
    %cst_5 = arith.constant 1.000000e+00 : f32
    %11 = vector.broadcast %cst_5 : f32 to vector<2x32xf32>
    %12 = arith.addf %11, %10 : vector<2x32xf32>
    %13 = arith.divf %11, %12 : vector<2x32xf32>
    %14 = vector.extract_strided_slice %7 {offsets = [0, 32], sizes = [2, 32], strides = [1, 1]} : vector<2x128xf32> to vector<2x32xf32>
    %15 = arith.negf %14 : vector<2x32xf32>
    %16 = math.exp %15 : vector<2x32xf32>
    %cst_6 = arith.constant 1.000000e+00 : f32
    %17 = vector.broadcast %cst_6 : f32 to vector<2x32xf32>
    %18 = arith.addf %17, %16 : vector<2x32xf32>
    %19 = arith.divf %17, %18 : vector<2x32xf32>
    %20 = vector.extract_strided_slice %7 {offsets = [0, 64], sizes = [2, 32], strides = [1, 1]} : vector<2x128xf32> to vector<2x32xf32>
    %21 = math.tanh %20 : vector<2x32xf32>
    %22 = vector.extract_strided_slice %7 {offsets = [0, 96], sizes = [2, 32], strides = [1, 1]} : vector<2x128xf32> to vector<2x32xf32>
    %23 = arith.negf %22 : vector<2x32xf32>
    %24 = math.exp %23 : vector<2x32xf32>
    %cst_7 = arith.constant 1.000000e+00 : f32
    %25 = vector.broadcast %cst_7 : f32 to vector<2x32xf32>
    %26 = arith.addf %25, %24 : vector<2x32xf32>
    %27 = arith.divf %25, %26 : vector<2x32xf32>
    %28 = arith.mulf %19, %2 : vector<2x32xf32>
    %29 = arith.mulf %13, %21 : vector<2x32xf32>
    %30 = arith.addf %28, %29 : vector<2x32xf32>
    %31 = math.tanh %30 : vector<2x32xf32>
    %32 = arith.mulf %27, %31 : vector<2x32xf32>
    %c1_i32 = arith.constant 1 : i32
    %33 = arith.index_cast %c1_i32 : i32 to index
    %c0_8 = arith.constant 0 : index
    %c0_9 = arith.constant 0 : index
    %34 = vector.load %arg0[%33, %c0_8, %c0_9] : memref<8x2x128xf32, #tpu.memory_space<vmem>>, vector<1x2x128xf32>
    %35 = vector.shape_cast %34 : vector<1x2x128xf32> to vector<2x128xf32>
    %cst_10 = arith.constant dense<0.000000e+00> : vector<2x128xf32>
    %36 = tpu.matmul %32, %0, %cst_10 {dimension_numbers = #tpu.dot_dimension_numbers<[1], [0], [0], [1], [0, 0, 1, 1], [], []>} : vector<2x32xf32>, vector<32x128xf32>, vector<2x128xf32> -> vector<2x128xf32>
    %37 = arith.addf %35, %36 : vector<2x128xf32>
    %38 = vector.extract_strided_slice %37 {offsets = [0, 0], sizes = [2, 32], strides = [1, 1]} : vector<2x128xf32> to vector<2x32xf32>
    %39 = arith.negf %38 : vector<2x32xf32>
    %40 = math.exp %39 : vector<2x32xf32>
    %cst_11 = arith.constant 1.000000e+00 : f32
    %41 = vector.broadcast %cst_11 : f32 to vector<2x32xf32>
    %42 = arith.addf %41, %40 : vector<2x32xf32>
    %43 = arith.divf %41, %42 : vector<2x32xf32>
    %44 = vector.extract_strided_slice %37 {offsets = [0, 32], sizes = [2, 32], strides = [1, 1]} : vector<2x128xf32> to vector<2x32xf32>
    %45 = arith.negf %44 : vector<2x32xf32>
    %46 = math.exp %45 : vector<2x32xf32>
    %cst_12 = arith.constant 1.000000e+00 : f32
    %47 = vector.broadcast %cst_12 : f32 to vector<2x32xf32>
    %48 = arith.addf %47, %46 : vector<2x32xf32>
    %49 = arith.divf %47, %48 : vector<2x32xf32>
    %50 = vector.extract_strided_slice %37 {offsets = [0, 64], sizes = [2, 32], strides = [1, 1]} : vector<2x128xf32> to vector<2x32xf32>
    %51 = math.tanh %50 : vector<2x32xf32>
    %52 = vector.extract_strided_slice %37 {offsets = [0, 96], sizes = [2, 32], strides = [1, 1]} : vector<2x128xf32> to vector<2x32xf32>
    %53 = arith.negf %52 : vector<2x32xf32>
    %54 = math.exp %53 : vector<2x32xf32>
    %cst_13 = arith.constant 1.000000e+00 : f32
    %55 = vector.broadcast %cst_13 : f32 to vector<2x32xf32>
    %56 = arith.addf %55, %54 : vector<2x32xf32>
    %57 = arith.divf %55, %56 : vector<2x32xf32>
    %58 = arith.mulf %49, %30 : vector<2x32xf32>
    %59 = arith.mulf %43, %51 : vector<2x32xf32>
    %60 = arith.addf %58, %59 : vector<2x32xf32>
    %61 = math.tanh %60 : vector<2x32xf32>
    %62 = arith.mulf %57, %61 : vector<2x32xf32>
    %c2_i32 = arith.constant 2 : i32
    %63 = arith.index_cast %c2_i32 : i32 to index
    %c0_14 = arith.constant 0 : index
    %c0_15 = arith.constant 0 : index
    %64 = vector.load %arg0[%63, %c0_14, %c0_15] : memref<8x2x128xf32, #tpu.memory_space<vmem>>, vector<1x2x128xf32>
    %65 = vector.shape_cast %64 : vector<1x2x128xf32> to vector<2x128xf32>
    %cst_16 = arith.constant dense<0.000000e+00> : vector<2x128xf32>
    %66 = tpu.matmul %62, %0, %cst_16 {dimension_numbers = #tpu.dot_dimension_numbers<[1], [0], [0], [1], [0, 0, 1, 1], [], []>} : vector<2x32xf32>, vector<32x128xf32>, vector<2x128xf32> -> vector<2x128xf32>
    %67 = arith.addf %65, %66 : vector<2x128xf32>
    %68 = vector.extract_strided_slice %67 {offsets = [0, 0], sizes = [2, 32], strides = [1, 1]} : vector<2x128xf32> to vector<2x32xf32>
    %69 = arith.negf %68 : vector<2x32xf32>
    %70 = math.exp %69 : vector<2x32xf32>
    %cst_17 = arith.constant 1.000000e+00 : f32
    %71 = vector.broadcast %cst_17 : f32 to vector<2x32xf32>
    %72 = arith.addf %71, %70 : vector<2x32xf32>
    %73 = arith.divf %71, %72 : vector<2x32xf32>
    %74 = vector.extract_strided_slice %67 {offsets = [0, 32], sizes = [2, 32], strides = [1, 1]} : vector<2x128xf32> to vector<2x32xf32>
    %75 = arith.negf %74 : vector<2x32xf32>
    %76 = math.exp %75 : vector<2x32xf32>
    %cst_18 = arith.constant 1.000000e+00 : f32
    %77 = vector.broadcast %cst_18 : f32 to vector<2x32xf32>
    %78 = arith.addf %77, %76 : vector<2x32xf32>
    %79 = arith.divf %77, %78 : vector<2x32xf32>
    %80 = vector.extract_strided_slice %67 {offsets = [0, 64], sizes = [2, 32], strides = [1, 1]} : vector<2x128xf32> to vector<2x32xf32>
    %81 = math.tanh %80 : vector<2x32xf32>
    %82 = vector.extract_strided_slice %67 {offsets = [0, 96], sizes = [2, 32], strides = [1, 1]} : vector<2x128xf32> to vector<2x32xf32>
    %83 = arith.negf %82 : vector<2x32xf32>
    %84 = math.exp %83 : vector<2x32xf32>
    %cst_19 = arith.constant 1.000000e+00 : f32
    %85 = vector.broadcast %cst_19 : f32 to vector<2x32xf32>
    %86 = arith.addf %85, %84 : vector<2x32xf32>
    %87 = arith.divf %85, %86 : vector<2x32xf32>
    %88 = arith.mulf %79, %60 : vector<2x32xf32>
    %89 = arith.mulf %73, %81 : vector<2x32xf32>
    %90 = arith.addf %88, %89 : vector<2x32xf32>
    %91 = math.tanh %90 : vector<2x32xf32>
    %92 = arith.mulf %87, %91 : vector<2x32xf32>
    %c3_i32 = arith.constant 3 : i32
    %93 = arith.index_cast %c3_i32 : i32 to index
    %c0_20 = arith.constant 0 : index
    %c0_21 = arith.constant 0 : index
    %94 = vector.load %arg0[%93, %c0_20, %c0_21] : memref<8x2x128xf32, #tpu.memory_space<vmem>>, vector<1x2x128xf32>
    %95 = vector.shape_cast %94 : vector<1x2x128xf32> to vector<2x128xf32>
    %cst_22 = arith.constant dense<0.000000e+00> : vector<2x128xf32>
    %96 = tpu.matmul %92, %0, %cst_22 {dimension_numbers = #tpu.dot_dimension_numbers<[1], [0], [0], [1], [0, 0, 1, 1], [], []>} : vector<2x32xf32>, vector<32x128xf32>, vector<2x128xf32> -> vector<2x128xf32>
    %97 = arith.addf %95, %96 : vector<2x128xf32>
    %98 = vector.extract_strided_slice %97 {offsets = [0, 0], sizes = [2, 32], strides = [1, 1]} : vector<2x128xf32> to vector<2x32xf32>
    %99 = arith.negf %98 : vector<2x32xf32>
    %100 = math.exp %99 : vector<2x32xf32>
    %cst_23 = arith.constant 1.000000e+00 : f32
    %101 = vector.broadcast %cst_23 : f32 to vector<2x32xf32>
    %102 = arith.addf %101, %100 : vector<2x32xf32>
    %103 = arith.divf %101, %102 : vector<2x32xf32>
    %104 = vector.extract_strided_slice %97 {offsets = [0, 32], sizes = [2, 32], strides = [1, 1]} : vector<2x128xf32> to vector<2x32xf32>
    %105 = arith.negf %104 : vector<2x32xf32>
    %106 = math.exp %105 : vector<2x32xf32>
    %cst_24 = arith.constant 1.000000e+00 : f32
    %107 = vector.broadcast %cst_24 : f32 to vector<2x32xf32>
    %108 = arith.addf %107, %106 : vector<2x32xf32>
    %109 = arith.divf %107, %108 : vector<2x32xf32>
    %110 = vector.extract_strided_slice %97 {offsets = [0, 64], sizes = [2, 32], strides = [1, 1]} : vector<2x128xf32> to vector<2x32xf32>
    %111 = math.tanh %110 : vector<2x32xf32>
    %112 = vector.extract_strided_slice %97 {offsets = [0, 96], sizes = [2, 32], strides = [1, 1]} : vector<2x128xf32> to vector<2x32xf32>
    %113 = arith.negf %112 : vector<2x32xf32>
    %114 = math.exp %113 : vector<2x32xf32>
    %cst_25 = arith.constant 1.000000e+00 : f32
    %115 = vector.broadcast %cst_25 : f32 to vector<2x32xf32>
    %116 = arith.addf %115, %114 : vector<2x32xf32>
    %117 = arith.divf %115, %116 : vector<2x32xf32>
    %118 = arith.mulf %109, %90 : vector<2x32xf32>
    %119 = arith.mulf %103, %111 : vector<2x32xf32>
    %120 = arith.addf %118, %119 : vector<2x32xf32>
    %121 = math.tanh %120 : vector<2x32xf32>
    %122 = arith.mulf %117, %121 : vector<2x32xf32>
    %c4_i32 = arith.constant 4 : i32
    %123 = arith.index_cast %c4_i32 : i32 to index
    %c0_26 = arith.constant 0 : index
    %c0_27 = arith.constant 0 : index
    %124 = vector.load %arg0[%123, %c0_26, %c0_27] : memref<8x2x128xf32, #tpu.memory_space<vmem>>, vector<1x2x128xf32>
    %125 = vector.shape_cast %124 : vector<1x2x128xf32> to vector<2x128xf32>
    %cst_28 = arith.constant dense<0.000000e+00> : vector<2x128xf32>
    %126 = tpu.matmul %122, %0, %cst_28 {dimension_numbers = #tpu.dot_dimension_numbers<[1], [0], [0], [1], [0, 0, 1, 1], [], []>} : vector<2x32xf32>, vector<32x128xf32>, vector<2x128xf32> -> vector<2x128xf32>
    %127 = arith.addf %125, %126 : vector<2x128xf32>
    %128 = vector.extract_strided_slice %127 {offsets = [0, 0], sizes = [2, 32], strides = [1, 1]} : vector<2x128xf32> to vector<2x32xf32>
    %129 = arith.negf %128 : vector<2x32xf32>
    %130 = math.exp %129 : vector<2x32xf32>
    %cst_29 = arith.constant 1.000000e+00 : f32
    %131 = vector.broadcast %cst_29 : f32 to vector<2x32xf32>
    %132 = arith.addf %131, %130 : vector<2x32xf32>
    %133 = arith.divf %131, %132 : vector<2x32xf32>
    %134 = vector.extract_strided_slice %127 {offsets = [0, 32], sizes = [2, 32], strides = [1, 1]} : vector<2x128xf32> to vector<2x32xf32>
    %135 = arith.negf %134 : vector<2x32xf32>
    %136 = math.exp %135 : vector<2x32xf32>
    %cst_30 = arith.constant 1.000000e+00 : f32
    %137 = vector.broadcast %cst_30 : f32 to vector<2x32xf32>
    %138 = arith.addf %137, %136 : vector<2x32xf32>
    %139 = arith.divf %137, %138 : vector<2x32xf32>
    %140 = vector.extract_strided_slice %127 {offsets = [0, 64], sizes = [2, 32], strides = [1, 1]} : vector<2x128xf32> to vector<2x32xf32>
    %141 = math.tanh %140 : vector<2x32xf32>
    %142 = vector.extract_strided_slice %127 {offsets = [0, 96], sizes = [2, 32], strides = [1, 1]} : vector<2x128xf32> to vector<2x32xf32>
    %143 = arith.negf %142 : vector<2x32xf32>
    %144 = math.exp %143 : vector<2x32xf32>
    %cst_31 = arith.constant 1.000000e+00 : f32
    %145 = vector.broadcast %cst_31 : f32 to vector<2x32xf32>
    %146 = arith.addf %145, %144 : vector<2x32xf32>
    %147 = arith.divf %145, %146 : vector<2x32xf32>
    %148 = arith.mulf %139, %120 : vector<2x32xf32>
    %149 = arith.mulf %133, %141 : vector<2x32xf32>
    %150 = arith.addf %148, %149 : vector<2x32xf32>
    %151 = math.tanh %150 : vector<2x32xf32>
    %152 = arith.mulf %147, %151 : vector<2x32xf32>
    %c5_i32 = arith.constant 5 : i32
    %153 = arith.index_cast %c5_i32 : i32 to index
    %c0_32 = arith.constant 0 : index
    %c0_33 = arith.constant 0 : index
    %154 = vector.load %arg0[%153, %c0_32, %c0_33] : memref<8x2x128xf32, #tpu.memory_space<vmem>>, vector<1x2x128xf32>
    %155 = vector.shape_cast %154 : vector<1x2x128xf32> to vector<2x128xf32>
    %cst_34 = arith.constant dense<0.000000e+00> : vector<2x128xf32>
    %156 = tpu.matmul %152, %0, %cst_34 {dimension_numbers = #tpu.dot_dimension_numbers<[1], [0], [0], [1], [0, 0, 1, 1], [], []>} : vector<2x32xf32>, vector<32x128xf32>, vector<2x128xf32> -> vector<2x128xf32>
    %157 = arith.addf %155, %156 : vector<2x128xf32>
    %158 = vector.extract_strided_slice %157 {offsets = [0, 0], sizes = [2, 32], strides = [1, 1]} : vector<2x128xf32> to vector<2x32xf32>
    %159 = arith.negf %158 : vector<2x32xf32>
    %160 = math.exp %159 : vector<2x32xf32>
    %cst_35 = arith.constant 1.000000e+00 : f32
    %161 = vector.broadcast %cst_35 : f32 to vector<2x32xf32>
    %162 = arith.addf %161, %160 : vector<2x32xf32>
    %163 = arith.divf %161, %162 : vector<2x32xf32>
    %164 = vector.extract_strided_slice %157 {offsets = [0, 32], sizes = [2, 32], strides = [1, 1]} : vector<2x128xf32> to vector<2x32xf32>
    %165 = arith.negf %164 : vector<2x32xf32>
    %166 = math.exp %165 : vector<2x32xf32>
    %cst_36 = arith.constant 1.000000e+00 : f32
    %167 = vector.broadcast %cst_36 : f32 to vector<2x32xf32>
    %168 = arith.addf %167, %166 : vector<2x32xf32>
    %169 = arith.divf %167, %168 : vector<2x32xf32>
    %170 = vector.extract_strided_slice %157 {offsets = [0, 64], sizes = [2, 32], strides = [1, 1]} : vector<2x128xf32> to vector<2x32xf32>
    %171 = math.tanh %170 : vector<2x32xf32>
    %172 = vector.extract_strided_slice %157 {offsets = [0, 96], sizes = [2, 32], strides = [1, 1]} : vector<2x128xf32> to vector<2x32xf32>
    %173 = arith.negf %172 : vector<2x32xf32>
    %174 = math.exp %173 : vector<2x32xf32>
    %cst_37 = arith.constant 1.000000e+00 : f32
    %175 = vector.broadcast %cst_37 : f32 to vector<2x32xf32>
    %176 = arith.addf %175, %174 : vector<2x32xf32>
    %177 = arith.divf %175, %176 : vector<2x32xf32>
    %178 = arith.mulf %169, %150 : vector<2x32xf32>
    %179 = arith.mulf %163, %171 : vector<2x32xf32>
    %180 = arith.addf %178, %179 : vector<2x32xf32>
    %181 = math.tanh %180 : vector<2x32xf32>
    %182 = arith.mulf %177, %181 : vector<2x32xf32>
    %c6_i32 = arith.constant 6 : i32
    %183 = arith.index_cast %c6_i32 : i32 to index
    %c0_38 = arith.constant 0 : index
    %c0_39 = arith.constant 0 : index
    %184 = vector.load %arg0[%183, %c0_38, %c0_39] : memref<8x2x128xf32, #tpu.memory_space<vmem>>, vector<1x2x128xf32>
    %185 = vector.shape_cast %184 : vector<1x2x128xf32> to vector<2x128xf32>
    %cst_40 = arith.constant dense<0.000000e+00> : vector<2x128xf32>
    %186 = tpu.matmul %182, %0, %cst_40 {dimension_numbers = #tpu.dot_dimension_numbers<[1], [0], [0], [1], [0, 0, 1, 1], [], []>} : vector<2x32xf32>, vector<32x128xf32>, vector<2x128xf32> -> vector<2x128xf32>
    %187 = arith.addf %185, %186 : vector<2x128xf32>
    %188 = vector.extract_strided_slice %187 {offsets = [0, 0], sizes = [2, 32], strides = [1, 1]} : vector<2x128xf32> to vector<2x32xf32>
    %189 = arith.negf %188 : vector<2x32xf32>
    %190 = math.exp %189 : vector<2x32xf32>
    %cst_41 = arith.constant 1.000000e+00 : f32
    %191 = vector.broadcast %cst_41 : f32 to vector<2x32xf32>
    %192 = arith.addf %191, %190 : vector<2x32xf32>
    %193 = arith.divf %191, %192 : vector<2x32xf32>
    %194 = vector.extract_strided_slice %187 {offsets = [0, 32], sizes = [2, 32], strides = [1, 1]} : vector<2x128xf32> to vector<2x32xf32>
    %195 = arith.negf %194 : vector<2x32xf32>
    %196 = math.exp %195 : vector<2x32xf32>
    %cst_42 = arith.constant 1.000000e+00 : f32
    %197 = vector.broadcast %cst_42 : f32 to vector<2x32xf32>
    %198 = arith.addf %197, %196 : vector<2x32xf32>
    %199 = arith.divf %197, %198 : vector<2x32xf32>
    %200 = vector.extract_strided_slice %187 {offsets = [0, 64], sizes = [2, 32], strides = [1, 1]} : vector<2x128xf32> to vector<2x32xf32>
    %201 = math.tanh %200 : vector<2x32xf32>
    %202 = vector.extract_strided_slice %187 {offsets = [0, 96], sizes = [2, 32], strides = [1, 1]} : vector<2x128xf32> to vector<2x32xf32>
    %203 = arith.negf %202 : vector<2x32xf32>
    %204 = math.exp %203 : vector<2x32xf32>
    %cst_43 = arith.constant 1.000000e+00 : f32
    %205 = vector.broadcast %cst_43 : f32 to vector<2x32xf32>
    %206 = arith.addf %205, %204 : vector<2x32xf32>
    %207 = arith.divf %205, %206 : vector<2x32xf32>
    %208 = arith.mulf %199, %180 : vector<2x32xf32>
    %209 = arith.mulf %193, %201 : vector<2x32xf32>
    %210 = arith.addf %208, %209 : vector<2x32xf32>
    %211 = math.tanh %210 : vector<2x32xf32>
    %212 = arith.mulf %207, %211 : vector<2x32xf32>
    %c7_i32 = arith.constant 7 : i32
    %213 = arith.index_cast %c7_i32 : i32 to index
    %c0_44 = arith.constant 0 : index
    %c0_45 = arith.constant 0 : index
    %214 = vector.load %arg0[%213, %c0_44, %c0_45] : memref<8x2x128xf32, #tpu.memory_space<vmem>>, vector<1x2x128xf32>
    %215 = vector.shape_cast %214 : vector<1x2x128xf32> to vector<2x128xf32>
    %cst_46 = arith.constant dense<0.000000e+00> : vector<2x128xf32>
    %216 = tpu.matmul %212, %0, %cst_46 {dimension_numbers = #tpu.dot_dimension_numbers<[1], [0], [0], [1], [0, 0, 1, 1], [], []>} : vector<2x32xf32>, vector<32x128xf32>, vector<2x128xf32> -> vector<2x128xf32>
    %217 = arith.addf %215, %216 : vector<2x128xf32>
    %218 = vector.extract_strided_slice %217 {offsets = [0, 0], sizes = [2, 32], strides = [1, 1]} : vector<2x128xf32> to vector<2x32xf32>
    %219 = arith.negf %218 : vector<2x32xf32>
    %220 = math.exp %219 : vector<2x32xf32>
    %cst_47 = arith.constant 1.000000e+00 : f32
    %221 = vector.broadcast %cst_47 : f32 to vector<2x32xf32>
    %222 = arith.addf %221, %220 : vector<2x32xf32>
    %223 = arith.divf %221, %222 : vector<2x32xf32>
    %224 = vector.extract_strided_slice %217 {offsets = [0, 32], sizes = [2, 32], strides = [1, 1]} : vector<2x128xf32> to vector<2x32xf32>
    %225 = arith.negf %224 : vector<2x32xf32>
    %226 = math.exp %225 : vector<2x32xf32>
    %cst_48 = arith.constant 1.000000e+00 : f32
    %227 = vector.broadcast %cst_48 : f32 to vector<2x32xf32>
    %228 = arith.addf %227, %226 : vector<2x32xf32>
    %229 = arith.divf %227, %228 : vector<2x32xf32>
    %230 = vector.extract_strided_slice %217 {offsets = [0, 64], sizes = [2, 32], strides = [1, 1]} : vector<2x128xf32> to vector<2x32xf32>
    %231 = math.tanh %230 : vector<2x32xf32>
    %232 = vector.extract_strided_slice %217 {offsets = [0, 96], sizes = [2, 32], strides = [1, 1]} : vector<2x128xf32> to vector<2x32xf32>
    %233 = arith.negf %232 : vector<2x32xf32>
    %234 = math.exp %233 : vector<2x32xf32>
    %cst_49 = arith.constant 1.000000e+00 : f32
    %235 = vector.broadcast %cst_49 : f32 to vector<2x32xf32>
    %236 = arith.addf %235, %234 : vector<2x32xf32>
    %237 = arith.divf %235, %236 : vector<2x32xf32>
    %238 = arith.mulf %229, %210 : vector<2x32xf32>
    %239 = arith.mulf %223, %231 : vector<2x32xf32>
    %240 = arith.addf %238, %239 : vector<2x32xf32>
    %241 = math.tanh %240 : vector<2x32xf32>
    %242 = arith.mulf %237, %241 : vector<2x32xf32>
    %c8_i32 = arith.constant 8 : i32
    %c0_50 = arith.constant 0 : index
    %c0_51 = arith.constant 0 : index
    %243 = vector.load %arg2[%c0_50, %c0_51] : memref<2x32xf32, #tpu.memory_space<vmem>>, vector<2x32xf32>
    tpu.vector_store %arg2[%c0_50, %c0_51], %242 {strides = array<i32>} : memref<2x32xf32, #tpu.memory_space<vmem>>, vector<2x32xf32>,
    return
  }
}

module attributes {stable_mosaic.version = 11 : i64} {
  func.func @film_conv_kernel(%arg0: memref<2x64x128xf32, #tpu.memory_space<vmem>>, %arg1: memref<128x128xf32, #tpu.memory_space<vmem>>, %arg2: memref<1x128xf32, #tpu.memory_space<vmem>>, %arg3: memref<2x32xf32, #tpu.memory_space<vmem>>, %arg4: memref<32x256xf32, #tpu.memory_space<vmem>>, %arg5: memref<1x256xf32, #tpu.memory_space<vmem>>, %arg6: memref<2x64x128xf32, #tpu.memory_space<vmem>>) attributes {dimension_semantics = [], scalar_prefetch = 0 : i64, scratch_operands = 0 : i64, tpu.core_type = #tpu.core_type<tc>} {
    %c0 = arith.constant 0 : index
    %c0_0 = arith.constant 0 : index
    %0 = vector.load %arg3[%c0, %c0_0] : memref<2x32xf32, #tpu.memory_space<vmem>>, vector<2x32xf32>
    %c0_1 = arith.constant 0 : index
    %c0_2 = arith.constant 0 : index
    %1 = vector.load %arg4[%c0_1, %c0_2] : memref<32x256xf32, #tpu.memory_space<vmem>>, vector<32x256xf32>
    %cst = arith.constant dense<0.000000e+00> : vector<2x256xf32>
    %2 = tpu.matmul %0, %1, %cst {dimension_numbers = #tpu.dot_dimension_numbers<[1], [0], [0], [1], [0, 0, 1, 1], [], []>} : vector<2x32xf32>, vector<32x256xf32>, vector<2x256xf32> -> vector<2x256xf32>
    %c0_3 = arith.constant 0 : index
    %c0_4 = arith.constant 0 : index
    %3 = vector.load %arg5[%c0_3, %c0_4] : memref<1x256xf32, #tpu.memory_space<vmem>>, vector<1x256xf32>
    %4 = vector.broadcast %3 : vector<1x256xf32> to vector<2x256xf32>
    %5 = arith.addf %2, %4 : vector<2x256xf32>
    %6 = vector.extract_strided_slice %5 {offsets = [0, 0], sizes = [2, 128], strides = [1, 1]} : vector<2x256xf32> to vector<2x128xf32>
    %7 = vector.shape_cast %6 : vector<2x128xf32> to vector<2x1x128xf32>
    %8 = vector.extract_strided_slice %5 {offsets = [0, 128], sizes = [2, 128], strides = [1, 1]} : vector<2x256xf32> to vector<2x128xf32>
    %9 = vector.shape_cast %8 : vector<2x128xf32> to vector<2x1x128xf32>
    %c0_5 = arith.constant 0 : index
    %c0_6 = arith.constant 0 : index
    %c0_7 = arith.constant 0 : index
    %10 = vector.load %arg0[%c0_5, %c0_6, %c0_7] : memref<2x64x128xf32, #tpu.memory_space<vmem>>, vector<2x64x128xf32>
    %11 = vector.shape_cast %10 : vector<2x64x128xf32> to vector<128x128xf32>
    %c0_8 = arith.constant 0 : index
    %c0_9 = arith.constant 0 : index
    %12 = vector.load %arg1[%c0_8, %c0_9] : memref<128x128xf32, #tpu.memory_space<vmem>>, vector<128x128xf32>
    %cst_10 = arith.constant dense<0.000000e+00> : vector<128x128xf32>
    %13 = tpu.matmul %11, %12, %cst_10 {dimension_numbers = #tpu.dot_dimension_numbers<[1], [0], [0], [1], [0, 0, 1, 1], [], []>} : vector<128x128xf32>, vector<128x128xf32>, vector<128x128xf32> -> vector<128x128xf32>
    %c0_11 = arith.constant 0 : index
    %c0_12 = arith.constant 0 : index
    %14 = vector.load %arg2[%c0_11, %c0_12] : memref<1x128xf32, #tpu.memory_space<vmem>>, vector<1x128xf32>
    %15 = vector.broadcast %14 : vector<1x128xf32> to vector<128x128xf32>
    %16 = arith.addf %13, %15 : vector<128x128xf32>
    %17 = vector.shape_cast %16 : vector<128x128xf32> to vector<2x64x128xf32>
    %18 = vector.broadcast %7 : vector<2x1x128xf32> to vector<2x64x128xf32>
    %19 = arith.mulf %18, %17 : vector<2x64x128xf32>
    %20 = vector.broadcast %9 : vector<2x1x128xf32> to vector<2x64x128xf32>
    %21 = arith.addf %19, %20 : vector<2x64x128xf32>
    %cst_13 = arith.constant 0.000000e+00 : f32
    %22 = vector.broadcast %cst_13 : f32 to vector<2x64x128xf32>
    %23 = arith.maximumf %21, %22 : vector<2x64x128xf32>
    %c0_14 = arith.constant 0 : index
    %c0_15 = arith.constant 0 : index
    %c0_16 = arith.constant 0 : index
    %24 = vector.load %arg6[%c0_14, %c0_15, %c0_16] : memref<2x64x128xf32, #tpu.memory_space<vmem>>, vector<2x64x128xf32>
    tpu.vector_store %arg6[%c0_14, %c0_15, %c0_16], %23 {strides = array<i32>} : memref<2x64x128xf32, #tpu.memory_space<vmem>>, vector<2x64x128xf32>,
    return
  }
}

module attributes {stable_mosaic.version = 11 : i64} {
  func.func @film_conv_kernel(%arg0: memref<2x16x1152xf32, #tpu.memory_space<vmem>>, %arg1: memref<1152x128xf32, #tpu.memory_space<vmem>>, %arg2: memref<1x128xf32, #tpu.memory_space<vmem>>, %arg3: memref<2x32xf32, #tpu.memory_space<vmem>>, %arg4: memref<32x256xf32, #tpu.memory_space<vmem>>, %arg5: memref<1x256xf32, #tpu.memory_space<vmem>>, %arg6: memref<2x16x128xf32, #tpu.memory_space<vmem>>) attributes {dimension_semantics = [], scalar_prefetch = 0 : i64, scratch_operands = 0 : i64, tpu.core_type = #tpu.core_type<tc>} {
    %c0 = arith.constant 0 : index
    %c0_0 = arith.constant 0 : index
    %0 = vector.load %arg3[%c0, %c0_0] : memref<2x32xf32, #tpu.memory_space<vmem>>, vector<2x32xf32>
    %c0_1 = arith.constant 0 : index
    %c0_2 = arith.constant 0 : index
    %1 = vector.load %arg4[%c0_1, %c0_2] : memref<32x256xf32, #tpu.memory_space<vmem>>, vector<32x256xf32>
    %cst = arith.constant dense<0.000000e+00> : vector<2x256xf32>
    %2 = tpu.matmul %0, %1, %cst {dimension_numbers = #tpu.dot_dimension_numbers<[1], [0], [0], [1], [0, 0, 1, 1], [], []>} : vector<2x32xf32>, vector<32x256xf32>, vector<2x256xf32> -> vector<2x256xf32>
    %c0_3 = arith.constant 0 : index
    %c0_4 = arith.constant 0 : index
    %3 = vector.load %arg5[%c0_3, %c0_4] : memref<1x256xf32, #tpu.memory_space<vmem>>, vector<1x256xf32>
    %4 = vector.broadcast %3 : vector<1x256xf32> to vector<2x256xf32>
    %5 = arith.addf %2, %4 : vector<2x256xf32>
    %6 = vector.extract_strided_slice %5 {offsets = [0, 0], sizes = [2, 128], strides = [1, 1]} : vector<2x256xf32> to vector<2x128xf32>
    %7 = vector.shape_cast %6 : vector<2x128xf32> to vector<2x1x128xf32>
    %8 = vector.extract_strided_slice %5 {offsets = [0, 128], sizes = [2, 128], strides = [1, 1]} : vector<2x256xf32> to vector<2x128xf32>
    %9 = vector.shape_cast %8 : vector<2x128xf32> to vector<2x1x128xf32>
    %c0_5 = arith.constant 0 : index
    %c0_6 = arith.constant 0 : index
    %c0_7 = arith.constant 0 : index
    %10 = vector.load %arg0[%c0_5, %c0_6, %c0_7] : memref<2x16x1152xf32, #tpu.memory_space<vmem>>, vector<2x16x1152xf32>
    %11 = vector.shape_cast %10 : vector<2x16x1152xf32> to vector<32x1152xf32>
    %c0_8 = arith.constant 0 : index
    %c0_9 = arith.constant 0 : index
    %12 = vector.load %arg1[%c0_8, %c0_9] : memref<1152x128xf32, #tpu.memory_space<vmem>>, vector<1152x128xf32>
    %cst_10 = arith.constant dense<0.000000e+00> : vector<32x128xf32>
    %13 = tpu.matmul %11, %12, %cst_10 {dimension_numbers = #tpu.dot_dimension_numbers<[1], [0], [0], [1], [0, 0, 1, 1], [], []>} : vector<32x1152xf32>, vector<1152x128xf32>, vector<32x128xf32> -> vector<32x128xf32>
    %c0_11 = arith.constant 0 : index
    %c0_12 = arith.constant 0 : index
    %14 = vector.load %arg2[%c0_11, %c0_12] : memref<1x128xf32, #tpu.memory_space<vmem>>, vector<1x128xf32>
    %15 = vector.broadcast %14 : vector<1x128xf32> to vector<32x128xf32>
    %16 = arith.addf %13, %15 : vector<32x128xf32>
    %17 = vector.shape_cast %16 : vector<32x128xf32> to vector<2x16x128xf32>
    %18 = vector.broadcast %7 : vector<2x1x128xf32> to vector<2x16x128xf32>
    %19 = arith.mulf %18, %17 : vector<2x16x128xf32>
    %20 = vector.broadcast %9 : vector<2x1x128xf32> to vector<2x16x128xf32>
    %21 = arith.addf %19, %20 : vector<2x16x128xf32>
    %cst_13 = arith.constant 0.000000e+00 : f32
    %22 = vector.broadcast %cst_13 : f32 to vector<2x16x128xf32>
    %23 = arith.maximumf %21, %22 : vector<2x16x128xf32>
    %c0_14 = arith.constant 0 : index
    %c0_15 = arith.constant 0 : index
    %c0_16 = arith.constant 0 : index
    %24 = vector.load %arg6[%c0_14, %c0_15, %c0_16] : memref<2x16x128xf32, #tpu.memory_space<vmem>>, vector<2x16x128xf32>
    tpu.vector_store %arg6[%c0_14, %c0_15, %c0_16], %23 {strides = array<i32>} : memref<2x16x128xf32, #tpu.memory_space<vmem>>, vector<2x16x128xf32>,
    return
  }
}

module attributes {stable_mosaic.version = 11 : i64} {
  func.func @head_kernel(%arg0: memref<2x2048xf32, #tpu.memory_space<vmem>>, %arg1: memref<2x32xf32, #tpu.memory_space<vmem>>, %arg2: memref<2048x32xf32, #tpu.memory_space<vmem>>, %arg3: memref<32x32xf32, #tpu.memory_space<vmem>>, %arg4: memref<1x32xf32, #tpu.memory_space<vmem>>, %arg5: memref<32x8xf32, #tpu.memory_space<vmem>>, %arg6: memref<1x8xf32, #tpu.memory_space<vmem>>, %arg7: memref<2x8xf32, #tpu.memory_space<vmem>>) attributes {dimension_semantics = [], scalar_prefetch = 0 : i64, scratch_operands = 0 : i64, tpu.core_type = #tpu.core_type<tc>} {
    %c0 = arith.constant 0 : index
    %c0_0 = arith.constant 0 : index
    %0 = vector.load %arg0[%c0, %c0_0] : memref<2x2048xf32, #tpu.memory_space<vmem>>, vector<2x2048xf32>
    %c0_1 = arith.constant 0 : index
    %c0_2 = arith.constant 0 : index
    %1 = vector.load %arg2[%c0_1, %c0_2] : memref<2048x32xf32, #tpu.memory_space<vmem>>, vector<2048x32xf32>
    %cst = arith.constant dense<0.000000e+00> : vector<2x32xf32>
    %2 = tpu.matmul %0, %1, %cst {dimension_numbers = #tpu.dot_dimension_numbers<[1], [0], [0], [1], [0, 0, 1, 1], [], []>} : vector<2x2048xf32>, vector<2048x32xf32>, vector<2x32xf32> -> vector<2x32xf32>
    %c0_3 = arith.constant 0 : index
    %c0_4 = arith.constant 0 : index
    %3 = vector.load %arg1[%c0_3, %c0_4] : memref<2x32xf32, #tpu.memory_space<vmem>>, vector<2x32xf32>
    %c0_5 = arith.constant 0 : index
    %c0_6 = arith.constant 0 : index
    %4 = vector.load %arg3[%c0_5, %c0_6] : memref<32x32xf32, #tpu.memory_space<vmem>>, vector<32x32xf32>
    %cst_7 = arith.constant dense<0.000000e+00> : vector<2x32xf32>
    %5 = tpu.matmul %3, %4, %cst_7 {dimension_numbers = #tpu.dot_dimension_numbers<[1], [0], [0], [1], [0, 0, 1, 1], [], []>} : vector<2x32xf32>, vector<32x32xf32>, vector<2x32xf32> -> vector<2x32xf32>
    %6 = arith.addf %2, %5 : vector<2x32xf32>
    %c0_8 = arith.constant 0 : index
    %c0_9 = arith.constant 0 : index
    %7 = vector.load %arg4[%c0_8, %c0_9] : memref<1x32xf32, #tpu.memory_space<vmem>>, vector<1x32xf32>
    %8 = vector.broadcast %7 : vector<1x32xf32> to vector<2x32xf32>
    %9 = arith.addf %6, %8 : vector<2x32xf32>
    %cst_10 = arith.constant 0.000000e+00 : f32
    %10 = vector.broadcast %cst_10 : f32 to vector<2x32xf32>
    %11 = arith.maximumf %9, %10 : vector<2x32xf32>
    %c0_11 = arith.constant 0 : index
    %c0_12 = arith.constant 0 : index
    %12 = vector.load %arg5[%c0_11, %c0_12] : memref<32x8xf32, #tpu.memory_space<vmem>>, vector<32x8xf32>
    %cst_13 = arith.constant dense<0.000000e+00> : vector<2x8xf32>
    %13 = tpu.matmul %11, %12, %cst_13 {dimension_numbers = #tpu.dot_dimension_numbers<[1], [0], [0], [1], [0, 0, 1, 1], [], []>} : vector<2x32xf32>, vector<32x8xf32>, vector<2x8xf32> -> vector<2x8xf32>
    %c0_14 = arith.constant 0 : index
    %c0_15 = arith.constant 0 : index
    %14 = vector.load %arg6[%c0_14, %c0_15] : memref<1x8xf32, #tpu.memory_space<vmem>>, vector<1x8xf32>
    %15 = vector.broadcast %14 : vector<1x8xf32> to vector<2x8xf32>
    %16 = arith.addf %13, %15 : vector<2x8xf32>
    %c0_16 = arith.constant 0 : index
    %c0_17 = arith.constant 0 : index
    %17 = vector.load %arg7[%c0_16, %c0_17] : memref<2x8xf32, #tpu.memory_space<vmem>>, vector<2x8xf32>
    tpu.vector_store %arg7[%c0_16, %c0_17], %16 {strides = array<i32>} : memref<2x8xf32, #tpu.memory_space<vmem>>, vector<2x8xf32>,
    return
  }
}

</mosaic_0001>

<llo_original>
// kernel: _lambda_.4
$region0: #{_lambda_.4}
  #allocation0 [shape = 'u32[]', space=smem, size = 0x4, offset = 0x4, fixed_abs, tag = 'smem constant byte address 0x4 - core index']
  #allocation1 [shape = 'u32[72,128]{1,0:T(1,128)}', space=vmem, size = 0x9000, scoped, tag = 'internal scratch']
  %s0 = inlined_call_operand.vmem [shape: f32[8,2,128], index: 0, kind: input, shape index: {}]
  %s1 = inlined_call_operand.vmem [shape: f32[32,128], index: 1, kind: input, shape index: {}]
  %s2 = inlined_call_operand.vmem [shape: f32[2,32], index: 2, kind: output, shape index: {}]
  %s3 = sld [smem:[#allocation0]]
  $region18: #{_lambda_.4} parent=0
    _
  %s5 = ssub.s32 1, %s3
  %s6 = scalar_select 0, %s5, %s3
  // Predicated region
  $region2: #{_lambda_.4} parent=0 // pred_check
    _
  $region3: #{_lambda_.4} parent=0 // pred_check_branch
    %8 = sbr.rel (0) target = $region5
  $region4: #{_lambda_.4} parent=0 // pred_region
    _
  $region5: #{_lambda_.4} parent=0 // pred_fallthru
    _
  // Predicated region
  $region6: #{_lambda_.4} parent=0 // pred_check
    _
  $region7: #{_lambda_.4} parent=0 // pred_check_branch
    %10 = sbr.rel (0) target = $region9
  $region8: #{_lambda_.4} parent=0 // pred_region
    _
  $region9: #{_lambda_.4} parent=0 // pred_fallthru
    _
  %v11 = vld [vmem:[%s1] sm:$0xff]
  %v12 = vld [vmem:[%s1 + $0x8] sm:$0xff]
  %v13 = vld [vmem:[%s1 + $0x10] sm:$0xff]
  %v14 = vld [vmem:[%s1 + $0x18] sm:$0xff]
  %v15 = vld [vmem:[%s0] sm:$0x3]
  %vm16 = vcmask 261120
  %v18 = vsel %vm16, 0.0, 0
  %20 = vmatpush.msra.mxu0 0.0
  %21 = vmatpush.msra.mxu0 0.0
  %22 = vmatpush.msra.mxu0 0.0
  %23 = vmatpush.msra.mxu0 0.0
  %24 = vmatpush.msra.mxu0 0.0
  %25 = vmatpush.msra.mxu0 0.0
  %26 = vmatpush.msra.mxu0 0.0
  %27 = vmatpush.msra.mxu0 0.0
  %28 = vmatpush.msra.mxu0 0.0
  %29 = vmatpush.msra.mxu0 0.0
  %30 = vmatpush.msra.mxu0 0.0
  %31 = vmatpush.msra.mxu0 0.0
  %32 = vmatpush.msra.mxu0 %v14
  %33 = vmatpush.msra.mxu0 %v13
  %34 = vmatpush.msra.mxu0 %v12
  %35 = vmatpush.msra.mxu0 %v11
  %36 = vmatmul.f32.gmra.mxu0 %v18
  %v37 = vpop.f32.mrf.mxu0
  %v38 = vadd.f32 0.0, %v37
  %39 = vdwg.mxu0
  %v40 = vadd.f32 %v15, %v38
  %v41 = vxor.u32 %v40, 2147483648
  %v42 = vmul.f32 %v41, 1.442695
  %v43 = vpow.pop %v42
  %v44 = vadd.f32 %v43, 1.0
  %v45 = vrcp.pop %v44
  %v46 = vmul.f32 %v44, %v45
  %v47 = vsub.f32 1.0, %v46
  %v48 = vmul.f32 %v45, %v47
  %v49 = vadd.f32 %v45, %v48
  %vm50 = vweird.f32 %v44
  %vm51 = vweird.f32 %v45
  %vm52 = vmor %vm50, %vm51
  %v53 = vsel %vm52, %v45, %v49
  %v54 = vand.u32 2147483647, %v44
  %vm55 = vcmp.eq.f32.partialorder %v54, 8.507059e+37
  %v56 = vand.u32 %v44, 2147483648
  %v57 = vor.u32 1.1754944e-38, %v56
  %v58 = vsel %vm55, %v57, %v53
  %v59 = vmul.f32 1.0, %v58
  %v60 = vtanh.pop %v40
  %v61 = vmul.f32 %v59, 0.0
  %63 = vrot.lane.b32.xlu0 %v60, 64
  %v64 = vpop.permute.xlu0 %63
  %v66 = vmul.f32 %v59, %v64
  %68 = vrot.lane.b32.xlu0 %v66, 32
  %v69 = vpop.permute.xlu0 %68
  %v71 = vadd.f32 %v61, %v69
  %v72 = vtanh.pop %v71
  %74 = vrot.lane.b32.xlu0 %v72, 64
  %v75 = vpop.permute.xlu0 %74
  %v77 = vmul.f32 %v59, %v75
  %s78 = scalar_lea.vmem %s0, 2
  %v79 = vld [vmem:[%s78] sm:$0x3]
  %81 = vrot.lane.b32.xlu0 %v77, 32
  %v82 = vpop.permute.xlu0 %81
  %v83 = vsel %vm16, %v82, 0
  %85 = vmatpush.msra.mxu0 0.0
  %86 = vmatpush.msra.mxu0 0.0
  %87 = vmatpush.msra.mxu0 0.0
  %88 = vmatpush.msra.mxu0 0.0
  %89 = vmatpush.msra.mxu0 0.0
  %90 = vmatpush.msra.mxu0 0.0
  %91 = vmatpush.msra.mxu0 0.0
  %92 = vmatpush.msra.mxu0 0.0
  %93 = vmatpush.msra.mxu0 0.0
  %94 = vmatpush.msra.mxu0 0.0
  %95 = vmatpush.msra.mxu0 0.0
  %96 = vmatpush.msra.mxu0 0.0
  %97 = vmatpush.msra.mxu0 %v14
  %98 = vmatpush.msra.mxu0 %v13
  %99 = vmatpush.msra.mxu0 %v12
  %100 = vmatpush.msra.mxu0 %v11
  %101 = vmatmul.f32.gmra.mxu0 %v83
  %v102 = vpop.f32.mrf.mxu0
  %v103 = vadd.f32 0.0, %v102
  %104 = vdwg.mxu0
  %v105 = vadd.f32 %v79, %v103
  %v106 = vxor.u32 %v105, 2147483648
  %v107 = vmul.f32 %v106, 1.442695
  %v108 = vpow.pop %v107
  %v109 = vadd.f32 %v108, 1.0
  %v110 = vrcp.pop %v109
  %v111 = vmul.f32 %v109, %v110
  %v112 = vsub.f32 1.0, %v111
  %v113 = vmul.f32 %v110, %v112
  %v114 = vadd.f32 %v110, %v113
  %vm115 = vweird.f32 %v109
  %vm116 = vweird.f32 %v110
  %vm117 = vmor %vm115, %vm116
  %v118 = vsel %vm117, %v110, %v114
  %v119 = vand.u32 2147483647, %v109
  %vm120 = vcmp.eq.f32.partialorder %v119, 8.507059e+37
  %v121 = vand.u32 %v109, 2147483648
  %v122 = vor.u32 1.1754944e-38, %v121
  %v123 = vsel %vm120, %v122, %v118
  %v124 = vmul.f32 1.0, %v123
  %v125 = vtanh.pop %v105
  %v126 = vmul.f32 %v124, %v71
  %128 = vrot.lane.b32.xlu0 %v125, 64
  %v129 = vpop.permute.xlu0 %128
  %v131 = vmul.f32 %v124, %v129
  %133 = vrot.lane.b32.xlu0 %v131, 32
  %v134 = vpop.permute.xlu0 %133
  %v136 = vadd.f32 %v126, %v134
  %v137 = vtanh.pop %v136
  %139 = vrot.lane.b32.xlu0 %v137, 64
  %v140 = vpop.permute.xlu0 %139
  %v142 = vmul.f32 %v124, %v140
  %s143 = scalar_lea.vmem %s0, 4
  %v144 = vld [vmem:[%s143] sm:$0x3]
  %146 = vrot.lane.b32.xlu0 %v142, 32
  %v147 = vpop.permute.xlu0 %146
  %v148 = vsel %vm16, %v147, 0
  %150 = vmatpush.msra.mxu0 0.0
  %151 = vmatpush.msra.mxu0 0.0
  %152 = vmatpush.msra.mxu0 0.0
  %153 = vmatpush.msra.mxu0 0.0
  %154 = vmatpush.msra.mxu0 0.0
  %155 = vmatpush.msra.mxu0 0.0
  %156 = vmatpush.msra.mxu0 0.0
  %157 = vmatpush.msra.mxu0 0.0
  %158 = vmatpush.msra.mxu0 0.0
  %159 = vmatpush.msra.mxu0 0.0
  %160 = vmatpush.msra.mxu0 0.0
  %161 = vmatpush.msra.mxu0 0.0
  %162 = vmatpush.msra.mxu0 %v14
  %163 = vmatpush.msra.mxu0 %v13
  %164 = vmatpush.msra.mxu0 %v12
  %165 = vmatpush.msra.mxu0 %v11
  %166 = vmatmul.f32.gmra.mxu0 %v148
  %v167 = vpop.f32.mrf.mxu0
  %v168 = vadd.f32 0.0, %v167
  %169 = vdwg.mxu0
  %v170 = vadd.f32 %v144, %v168
  %v171 = vxor.u32 %v170, 2147483648
  %v172 = vmul.f32 %v171, 1.442695
  %v173 = vpow.pop %v172
  %v174 = vadd.f32 %v173, 1.0
  %v175 = vrcp.pop %v174
  %v176 = vmul.f32 %v174, %v175
  %v177 = vsub.f32 1.0, %v176
  %v178 = vmul.f32 %v175, %v177
  %v179 = vadd.f32 %v175, %v178
  %vm180 = vweird.f32 %v174
  %vm181 = vweird.f32 %v175
  %vm182 = vmor %vm180, %vm181
  %v183 = vsel %vm182, %v175, %v179
  %v184 = vand.u32 2147483647, %v174
  %vm185 = vcmp.eq.f32.partialorder %v184, 8.507059e+37
  %v186 = vand.u32 %v174, 2147483648
  %v187 = vor.u32 1.1754944e-38, %v186
  %v188 = vsel %vm185, %v187, %v183
  %v189 = vmul.f32 1.0, %v188
  %v190 = vtanh.pop %v170
  %v191 = vmul.f32 %v189, %v136
  %193 = vrot.lane.b32.xlu0 %v190, 64
  %v194 = vpop.permute.xlu0 %193
  %v196 = vmul.f32 %v189, %v194
  %198 = vrot.lane.b32.xlu0 %v196, 32
  %v199 = vpop.permute.xlu0 %198
  %v201 = vadd.f32 %v191, %v199
  %v202 = vtanh.pop %v201
  %204 = vrot.lane.b32.xlu0 %v202, 64
  %v205 = vpop.permute.xlu0 %204
  %v207 = vmul.f32 %v189, %v205
  %s208 = scalar_lea.vmem %s0, 6
  %v209 = vld [vmem:[%s208] sm:$0x3]
  %211 = vrot.lane.b32.xlu0 %v207, 32
  %v212 = vpop.permute.xlu0 %211
  %v213 = vsel %vm16, %v212, 0
  %215 = vmatpush.msra.mxu0 0.0
  %216 = vmatpush.msra.mxu0 0.0
  %217 = vmatpush.msra.mxu0 0.0
  %218 = vmatpush.msra.mxu0 0.0
  %219 = vmatpush.msra.mxu0 0.0
  %220 = vmatpush.msra.mxu0 0.0
  %221 = vmatpush.msra.mxu0 0.0
  %222 = vmatpush.msra.mxu0 0.0
  %223 = vmatpush.msra.mxu0 0.0
  %224 = vmatpush.msra.mxu0 0.0
  %225 = vmatpush.msra.mxu0 0.0
  %226 = vmatpush.msra.mxu0 0.0
  %227 = vmatpush.msra.mxu0 %v14
  %228 = vmatpush.msra.mxu0 %v13
  %229 = vmatpush.msra.mxu0 %v12
  %230 = vmatpush.msra.mxu0 %v11
  %231 = vmatmul.f32.gmra.mxu0 %v213
  %v232 = vpop.f32.mrf.mxu0
  %v233 = vadd.f32 0.0, %v232
  %234 = vdwg.mxu0
  %v235 = vadd.f32 %v209, %v233
  %v236 = vxor.u32 %v235, 2147483648
  %v237 = vmul.f32 %v236, 1.442695
  %v238 = vpow.pop %v237
  %v239 = vadd.f32 %v238, 1.0
  %v240 = vrcp.pop %v239
  %v241 = vmul.f32 %v239, %v240
  %v242 = vsub.f32 1.0, %v241
  %v243 = vmul.f32 %v240, %v242
  %v244 = vadd.f32 %v240, %v243
  %vm245 = vweird.f32 %v239
  %vm246 = vweird.f32 %v240
  %vm247 = vmor %vm245, %vm246
  %v248 = vsel %vm247, %v240, %v244
  %v249 = vand.u32 2147483647, %v239
  %vm250 = vcmp.eq.f32.partialorder %v249, 8.507059e+37
  %v251 = vand.u32 %v239, 2147483648
  %v252 = vor.u32 1.1754944e-38, %v251
  %v253 = vsel %vm250, %v252, %v248
  %v254 = vmul.f32 1.0, %v253
  %v255 = vtanh.pop %v235
  %v256 = vmul.f32 %v254, %v201
  %258 = vrot.lane.b32.xlu0 %v255, 64
  %v259 = vpop.permute.xlu0 %258
  %v261 = vmul.f32 %v254, %v259
  %263 = vrot.lane.b32.xlu0 %v261, 32
  %v264 = vpop.permute.xlu0 %263
  %v266 = vadd.f32 %v256, %v264
  %v267 = vtanh.pop %v266
  %269 = vrot.lane.b32.xlu0 %v267, 64
  %v270 = vpop.permute.xlu0 %269
  %v272 = vmul.f32 %v254, %v270
  %s273 = scalar_lea.vmem %s0, 8
  %v274 = vld [vmem:[%s273] sm:$0x3]
  %276 = vrot.lane.b32.xlu0 %v272, 32
  %v277 = vpop.permute.xlu0 %276
  %v278 = vsel %vm16, %v277, 0
  %280 = vmatpush.msra.mxu0 0.0
  %281 = vmatpush.msra.mxu0 0.0
  %282 = vmatpush.msra.mxu0 0.0
  %283 = vmatpush.msra.mxu0 0.0
  %284 = vmatpush.msra.mxu0 0.0
  %285 = vmatpush.msra.mxu0 0.0
  %286 = vmatpush.msra.mxu0 0.0
  %287 = vmatpush.msra.mxu0 0.0
  %288 = vmatpush.msra.mxu0 0.0
  %289 = vmatpush.msra.mxu0 0.0
  %290 = vmatpush.msra.mxu0 0.0
  %291 = vmatpush.msra.mxu0 0.0
  %292 = vmatpush.msra.mxu0 %v14
  %293 = vmatpush.msra.mxu0 %v13
  %294 = vmatpush.msra.mxu0 %v12
  %295 = vmatpush.msra.mxu0 %v11
  %296 = vmatmul.f32.gmra.mxu0 %v278
  %v297 = vpop.f32.mrf.mxu0
  %v298 = vadd.f32 0.0, %v297
  %299 = vdwg.mxu0
  %v300 = vadd.f32 %v274, %v298
  %v301 = vxor.u32 %v300, 2147483648
  %v302 = vmul.f32 %v301, 1.442695
  %v303 = vpow.pop %v302
  %v304 = vadd.f32 %v303, 1.0
  %v305 = vrcp.pop %v304
  %v306 = vmul.f32 %v304, %v305
  %v307 = vsub.f32 1.0, %v306
  %v308 = vmul.f32 %v305, %v307
  %v309 = vadd.f32 %v305, %v308
  %vm310 = vweird.f32 %v304
  %vm311 = vweird.f32 %v305
  %vm312 = vmor %vm310, %vm311
  %v313 = vsel %vm312, %v305, %v309
  %v314 = vand.u32 2147483647, %v304
  %vm315 = vcmp.eq.f32.partialorder %v314, 8.507059e+37
  %v316 = vand.u32 %v304, 2147483648
  %v317 = vor.u32 1.1754944e-38, %v316
  %v318 = vsel %vm315, %v317, %v313
  %v319 = vmul.f32 1.0, %v318
  %v320 = vtanh.pop %v300
  %v321 = vmul.f32 %v319, %v266
  %323 = vrot.lane.b32.xlu0 %v320, 64
  %v324 = vpop.permute.xlu0 %323
  %v326 = vmul.f32 %v319, %v324
  %328 = vrot.lane.b32.xlu0 %v326, 32
  %v329 = vpop.permute.xlu0 %328
  %v331 = vadd.f32 %v321, %v329
  %v332 = vtanh.pop %v331
  %334 = vrot.lane.b32.xlu0 %v332, 64
  %v335 = vpop.permute.xlu0 %334
  %v337 = vmul.f32 %v319, %v335
  %s338 = scalar_lea.vmem %s0, 10
  %v339 = vld [vmem:[%s338] sm:$0x3]
  %341 = vrot.lane.b32.xlu0 %v337, 32
  %v342 = vpop.permute.xlu0 %341
  %v343 = vsel %vm16, %v342, 0
  %345 = vmatpush.msra.mxu0 0.0
  %346 = vmatpush.msra.mxu0 0.0
  %347 = vmatpush.msra.mxu0 0.0
  %348 = vmatpush.msra.mxu0 0.0
  %349 = vmatpush.msra.mxu0 0.0
  %350 = vmatpush.msra.mxu0 0.0
  %351 = vmatpush.msra.mxu0 0.0
  %352 = vmatpush.msra.mxu0 0.0
  %353 = vmatpush.msra.mxu0 0.0
  %354 = vmatpush.msra.mxu0 0.0
  %355 = vmatpush.msra.mxu0 0.0
  %356 = vmatpush.msra.mxu0 0.0
  %357 = vmatpush.msra.mxu0 %v14
  %358 = vmatpush.msra.mxu0 %v13
  %359 = vmatpush.msra.mxu0 %v12
  %360 = vmatpush.msra.mxu0 %v11
  %361 = vmatmul.f32.gmra.mxu0 %v343
  %v362 = vpop.f32.mrf.mxu0
  %v363 = vadd.f32 0.0, %v362
  %364 = vdwg.mxu0
  %v365 = vadd.f32 %v339, %v363
  %v366 = vxor.u32 %v365, 2147483648
  %v367 = vmul.f32 %v366, 1.442695
  %v368 = vpow.pop %v367
  %v369 = vadd.f32 %v368, 1.0
  %v370 = vrcp.pop %v369
  %v371 = vmul.f32 %v369, %v370
  %v372 = vsub.f32 1.0, %v371
  %v373 = vmul.f32 %v370, %v372
  %v374 = vadd.f32 %v370, %v373
  %vm375 = vweird.f32 %v369
  %vm376 = vweird.f32 %v370
  %vm377 = vmor %vm375, %vm376
  %v378 = vsel %vm377, %v370, %v374
  %v379 = vand.u32 2147483647, %v369
  %vm380 = vcmp.eq.f32.partialorder %v379, 8.507059e+37
  %v381 = vand.u32 %v369, 2147483648
  %v382 = vor.u32 1.1754944e-38, %v381
  %v383 = vsel %vm380, %v382, %v378
  %v384 = vmul.f32 1.0, %v383
  %v385 = vtanh.pop %v365
  %v386 = vmul.f32 %v384, %v331
  %388 = vrot.lane.b32.xlu0 %v385, 64
  %v389 = vpop.permute.xlu0 %388
  %v391 = vmul.f32 %v384, %v389
  %393 = vrot.lane.b32.xlu0 %v391, 32
  %v394 = vpop.permute.xlu0 %393
  %v396 = vadd.f32 %v386, %v394
  %v397 = vtanh.pop %v396
  %399 = vrot.lane.b32.xlu0 %v397, 64
  %v400 = vpop.permute.xlu0 %399
  %v402 = vmul.f32 %v384, %v400
  %s403 = scalar_lea.vmem %s0, 12
  %v404 = vld [vmem:[%s403] sm:$0x3]
  %406 = vrot.lane.b32.xlu0 %v402, 32
  %v407 = vpop.permute.xlu0 %406
  %v408 = vsel %vm16, %v407, 0
  %410 = vmatpush.msra.mxu0 0.0
  %411 = vmatpush.msra.mxu0 0.0
  %412 = vmatpush.msra.mxu0 0.0
  %413 = vmatpush.msra.mxu0 0.0
  %414 = vmatpush.msra.mxu0 0.0
  %415 = vmatpush.msra.mxu0 0.0
  %416 = vmatpush.msra.mxu0 0.0
  %417 = vmatpush.msra.mxu0 0.0
  %418 = vmatpush.msra.mxu0 0.0
  %419 = vmatpush.msra.mxu0 0.0
  %420 = vmatpush.msra.mxu0 0.0
  %421 = vmatpush.msra.mxu0 0.0
  %422 = vmatpush.msra.mxu0 %v14
  %423 = vmatpush.msra.mxu0 %v13
  %424 = vmatpush.msra.mxu0 %v12
  %425 = vmatpush.msra.mxu0 %v11
  %426 = vmatmul.f32.gmra.mxu0 %v408
  %v427 = vpop.f32.mrf.mxu0
  %v428 = vadd.f32 0.0, %v427
  %429 = vdwg.mxu0
  %v430 = vadd.f32 %v404, %v428
  %v431 = vxor.u32 %v430, 2147483648
  %v432 = vmul.f32 %v431, 1.442695
  %v433 = vpow.pop %v432
  %v434 = vadd.f32 %v433, 1.0
  %v435 = vrcp.pop %v434
  %v436 = vmul.f32 %v434, %v435
  %v437 = vsub.f32 1.0, %v436
  %v438 = vmul.f32 %v435, %v437
  %v439 = vadd.f32 %v435, %v438
  %vm440 = vweird.f32 %v434
  %vm441 = vweird.f32 %v435
  %vm442 = vmor %vm440, %vm441
  %v443 = vsel %vm442, %v435, %v439
  %v444 = vand.u32 2147483647, %v434
  %vm445 = vcmp.eq.f32.partialorder %v444, 8.507059e+37
  %v446 = vand.u32 %v434, 2147483648
  %v447 = vor.u32 1.1754944e-38, %v446
  %v448 = vsel %vm445, %v447, %v443
  %v449 = vmul.f32 1.0, %v448
  %v450 = vtanh.pop %v430
  %v451 = vmul.f32 %v449, %v396
  %453 = vrot.lane.b32.xlu0 %v450, 64
  %v454 = vpop.permute.xlu0 %453
  %v456 = vmul.f32 %v449, %v454
  %458 = vrot.lane.b32.xlu0 %v456, 32
  %v459 = vpop.permute.xlu0 %458
  %v461 = vadd.f32 %v451, %v459
  %v462 = vtanh.pop %v461
  %464 = vrot.lane.b32.xlu0 %v462, 64
  %v465 = vpop.permute.xlu0 %464
  %v467 = vmul.f32 %v449, %v465
  %s468 = scalar_lea.vmem %s0, 14
  %v469 = vld [vmem:[%s468] sm:$0x3]
  %471 = vrot.lane.b32.xlu0 %v467, 32
  %v472 = vpop.permute.xlu0 %471
  %v473 = vsel %vm16, %v472, 0
  %475 = vmatpush.msra.mxu0 0.0
  %476 = vmatpush.msra.mxu0 0.0
  %477 = vmatpush.msra.mxu0 0.0
  %478 = vmatpush.msra.mxu0 0.0
  %479 = vmatpush.msra.mxu0 0.0
  %480 = vmatpush.msra.mxu0 0.0
  %481 = vmatpush.msra.mxu0 0.0
  %482 = vmatpush.msra.mxu0 0.0
  %483 = vmatpush.msra.mxu0 0.0
  %484 = vmatpush.msra.mxu0 0.0
  %485 = vmatpush.msra.mxu0 0.0
  %486 = vmatpush.msra.mxu0 0.0
  %487 = vmatpush.msra.mxu0 %v14
  %488 = vmatpush.msra.mxu0 %v13
  %489 = vmatpush.msra.mxu0 %v12
  %490 = vmatpush.msra.mxu0 %v11
  %491 = vmatmul.f32.gmra.mxu0 %v473
  %v492 = vpop.f32.mrf.mxu0
  %v493 = vadd.f32 0.0, %v492
  %494 = vdwg.mxu0
  %v495 = vadd.f32 %v469, %v493
  %v496 = vxor.u32 %v495, 2147483648
  %v497 = vmul.f32 %v496, 1.442695
  %v498 = vpow.pop %v497
  %v499 = vadd.f32 %v498, 1.0
  %v500 = vrcp.pop %v499
  %v501 = vmul.f32 %v499, %v500
  %v502 = vsub.f32 1.0, %v501
  %v503 = vmul.f32 %v500, %v502
  %v504 = vadd.f32 %v500, %v503
  %vm505 = vweird.f32 %v499
  %vm506 = vweird.f32 %v500
  %vm507 = vmor %vm505, %vm506
  %v508 = vsel %vm507, %v500, %v504
  %v509 = vand.u32 2147483647, %v499
  %vm510 = vcmp.eq.f32.partialorder %v509, 8.507059e+37
  %v511 = vand.u32 %v499, 2147483648
  %v512 = vor.u32 1.1754944e-38, %v511
  %v513 = vsel %vm510, %v512, %v508
  %v514 = vmul.f32 1.0, %v513
  %v515 = vtanh.pop %v495
  %v516 = vmul.f32 %v514, %v461
  %518 = vrot.lane.b32.xlu0 %v515, 64
  %v519 = vpop.permute.xlu0 %518
  %v521 = vmul.f32 %v514, %v519
  %523 = vrot.lane.b32.xlu0 %v521, 32
  %v524 = vpop.permute.xlu0 %523
  %v526 = vadd.f32 %v516, %v524
  %v527 = vtanh.pop %v526
  %529 = vrot.lane.b32.xlu0 %v527, 64
  %v530 = vpop.permute.xlu0 %529
  %v532 = vmul.f32 %v514, %v530
  %534 = vrot.lane.b32.xlu0 %v532, 32
  %v535 = vpop.permute.xlu0 %534
  %vm537 = vcmask 254976
  %538 = vst.msk [vmem:[%s2] sm:$0x3] %vm537, %v535
  // Predicated region
  $region10: #{_lambda_.4} parent=0 // pred_check
    _
  $region11: #{_lambda_.4} parent=0 // pred_check_branch
    %540 = sbr.rel (0) target = $region13
  $region12: #{_lambda_.4} parent=0 // pred_region
    _
  $region13: #{_lambda_.4} parent=0 // pred_fallthru
    _
  // Predicated region
  $region14: #{_lambda_.4} parent=0 // pred_check
    _
  $region15: #{_lambda_.4} parent=0 // pred_check_branch
    %542 = sbr.rel (0) target = $region17
  $region16: #{_lambda_.4} parent=0 // pred_region
    _
  $region17: #{_lambda_.4} parent=0 // pred_fallthru
    _

// kernel: _lambda_.5
$region0: #{_lambda_.5}
  #allocation0 [shape = 'u32[]', space=smem, size = 0x4, offset = 0x4, fixed_abs, tag = 'smem constant byte address 0x4 - core index']
  #allocation1 [shape = 'u32[72,128]{1,0:T(1,128)}', space=vmem, size = 0x9000, scoped, tag = 'internal scratch']
  %s0 = inlined_call_operand.vmem [shape: f32[2,64,128], index: 0, kind: input, shape index: {}]
  %s1 = inlined_call_operand.vmem [shape: f32[128,128], index: 1, kind: input, shape index: {}]
  %s2 = inlined_call_operand.vmem [shape: f32[1,128], index: 2, kind: input, shape index: {}]
  %s3 = inlined_call_operand.vmem [shape: f32[2,32], index: 3, kind: input, shape index: {}]
  %s4 = inlined_call_operand.vmem [shape: f32[32,256], index: 4, kind: input, shape index: {}]
  %s5 = inlined_call_operand.vmem [shape: f32[1,256], index: 5, kind: input, shape index: {}]
  %s6 = inlined_call_operand.vmem [shape: f32[2,64,128], index: 6, kind: output, shape index: {}]
  %s7 = sld [smem:[#allocation0]]
  $region34: #{_lambda_.5} parent=0
    _
  %s9 = ssub.s32 1, %s7
  %s10 = scalar_select 0, %s9, %s7
  // Predicated region
  $region2: #{_lambda_.5} parent=0 // pred_check
    _
  $region3: #{_lambda_.5} parent=0 // pred_check_branch
    %12 = sbr.rel (0) target = $region5
  $region4: #{_lambda_.5} parent=0 // pred_region
    _
  $region5: #{_lambda_.5} parent=0 // pred_fallthru
    _
  // Predicated region
  $region6: #{_lambda_.5} parent=0 // pred_check
    _
  $region7: #{_lambda_.5} parent=0 // pred_check_branch
    %14 = sbr.rel (0) target = $region9
  $region8: #{_lambda_.5} parent=0 // pred_region
    _
  $region9: #{_lambda_.5} parent=0 // pred_fallthru
    _
  // Predicated region
  $region10: #{_lambda_.5} parent=0 // pred_check
    _
  $region11: #{_lambda_.5} parent=0 // pred_check_branch
    %16 = sbr.rel (0) target = $region13
  $region12: #{_lambda_.5} parent=0 // pred_region
    _
  $region13: #{_lambda_.5} parent=0 // pred_fallthru
    _
  // Predicated region
  $region14: #{_lambda_.5} parent=0 // pred_check
    _
  $region15: #{_lambda_.5} parent=0 // pred_check_branch
    %18 = sbr.rel (0) target = $region17
  $region16: #{_lambda_.5} parent=0 // pred_region
    _
  $region17: #{_lambda_.5} parent=0 // pred_fallthru
    _
  // Predicated region
  $region18: #{_lambda_.5} parent=0 // pred_check
    _
  $region19: #{_lambda_.5} parent=0 // pred_check_branch
    %20 = sbr.rel (0) target = $region21
  $region20: #{_lambda_.5} parent=0 // pred_region
    _
  $region21: #{_lambda_.5} parent=0 // pred_fallthru
    _
  // Predicated region
  $region22: #{_lambda_.5} parent=0 // pred_check
    _
  $region23: #{_lambda_.5} parent=0 // pred_check_branch
    %22 = sbr.rel (0) target = $region25
  $region24: #{_lambda_.5} parent=0 // pred_region
    _
  $region25: #{_lambda_.5} parent=0 // pred_fallthru
    _
  %v23 = vld [vmem:[%s3] sm:$0x3]
  %v24 = vld [vmem:[%s4] sm:$0xff]
  %v25 = vld [vmem:[%s4 + $0x8] sm:$0xff]
  %v26 = vld [vmem:[%s4 + $0x10] sm:$0xff]
  %v27 = vld [vmem:[%s4 + $0x18] sm:$0xff]
  %v28 = vld [vmem:[%s4 + $0x20] sm:$0xff]
  %v29 = vld [vmem:[%s4 + $0x28] sm:$0xff]
  %v30 = vld [vmem:[%s4 + $0x30] sm:$0xff]
  %v31 = vld [vmem:[%s4 + $0x38] sm:$0xff]
  %v32 = vld [vmem:[%s5] sm:$0x3]
  %v34 = vperm.slane %v32, 0
  %v35 = vperm.slane %v32, 1
  %vm38 = vcmask 261120
  %v40 = vsel %vm38, %v23, 0
  %42 = vmatpush.msra.mxu0 0.0
  %43 = vmatpush.msra.mxu0 0.0
  %44 = vmatpush.msra.mxu0 0.0
  %45 = vmatpush.msra.mxu0 0.0
  %46 = vmatpush.msra.mxu0 0.0
  %47 = vmatpush.msra.mxu0 0.0
  %48 = vmatpush.msra.mxu0 0.0
  %49 = vmatpush.msra.mxu0 0.0
  %50 = vmatpush.msra.mxu0 0.0
  %51 = vmatpush.msra.mxu0 0.0
  %52 = vmatpush.msra.mxu0 0.0
  %53 = vmatpush.msra.mxu0 0.0
  %54 = vmatpush.msra.mxu0 %v30
  %55 = vmatpush.msra.mxu0 %v28
  %56 = vmatpush.msra.mxu0 %v26
  %57 = vmatpush.msra.mxu0 %v24
  %58 = vmatmul.f32.gmra.mxu0 %v40
  %v59 = vpop.f32.mrf.mxu0
  %v60 = vadd.f32 %v34, %v59
  %61 = vdwg.mxu0
  %62 = vmatpush.msra.mxu0 0.0
  %63 = vmatpush.msra.mxu0 0.0
  %64 = vmatpush.msra.mxu0 0.0
  %65 = vmatpush.msra.mxu0 0.0
  %66 = vmatpush.msra.mxu0 0.0
  %67 = vmatpush.msra.mxu0 0.0
  %68 = vmatpush.msra.mxu0 0.0
  %69 = vmatpush.msra.mxu0 0.0
  %70 = vmatpush.msra.mxu0 0.0
  %71 = vmatpush.msra.mxu0 0.0
  %72 = vmatpush.msra.mxu0 0.0
  %73 = vmatpush.msra.mxu0 0.0
  %74 = vmatpush.msra.mxu0 %v31
  %75 = vmatpush.msra.mxu0 %v29
  %76 = vmatpush.msra.mxu0 %v27
  %77 = vmatpush.msra.mxu0 %v25
  %78 = vmatmul.f32.gmra.mxu0 %v40
  %v79 = vpop.f32.mrf.mxu0
  %v80 = vadd.f32 %v35, %v79
  %81 = vdwg.mxu0
  %v83 = vrot.slane %v60, 1
  %v85 = vrot.slane %v80, 1
  %v86 = vld [vmem:[%s0] sm:$0xff]
  %v87 = vld [vmem:[%s0 + $0x8] sm:$0xff]
  %v88 = vld [vmem:[%s0 + $0x10] sm:$0xff]
  %v89 = vld [vmem:[%s0 + $0x18] sm:$0xff]
  %v90 = vld [vmem:[%s0 + $0x20] sm:$0xff]
  %v91 = vld [vmem:[%s0 + $0x28] sm:$0xff]
  %v92 = vld [vmem:[%s0 + $0x30] sm:$0xff]
  %v93 = vld [vmem:[%s0 + $0x38] sm:$0xff]
  %v94 = vld [vmem:[%s0 + $0x40] sm:$0xff]
  %v95 = vld [vmem:[%s0 + $0x48] sm:$0xff]
  %v96 = vld [vmem:[%s0 + $0x50] sm:$0xff]
  %v97 = vld [vmem:[%s0 + $0x58] sm:$0xff]
  %v98 = vld [vmem:[%s0 + $0x60] sm:$0xff]
  %v99 = vld [vmem:[%s0 + $0x68] sm:$0xff]
  %v100 = vld [vmem:[%s0 + $0x70] sm:$0xff]
  %v101 = vld [vmem:[%s0 + $0x78] sm:$0xff]
  %v102 = vld [vmem:[%s1] sm:$0xff]
  %v103 = vld [vmem:[%s1 + $0x8] sm:$0xff]
  %v104 = vld [vmem:[%s1 + $0x10] sm:$0xff]
  %v105 = vld [vmem:[%s1 + $0x18] sm:$0xff]
  %v106 = vld [vmem:[%s1 + $0x20] sm:$0xff]
  %v107 = vld [vmem:[%s1 + $0x28] sm:$0xff]
  %v108 = vld [vmem:[%s1 + $0x30] sm:$0xff]
  %v109 = vld [vmem:[%s1 + $0x38] sm:$0xff]
  %v110 = vld [vmem:[%s1 + $0x40] sm:$0xff]
  %v111 = vld [vmem:[%s1 + $0x48] sm:$0xff]
  %v112 = vld [vmem:[%s1 + $0x50] sm:$0xff]
  %v113 = vld [vmem:[%s1 + $0x58] sm:$0xff]
  %v114 = vld [vmem:[%s1 + $0x60] sm:$0xff]
  %v115 = vld [vmem:[%s1 + $0x68] sm:$0xff]
  %v116 = vld [vmem:[%s1 + $0x70] sm:$0xff]
  %v117 = vld [vmem:[%s1 + $0x78] sm:$0xff]
  %v118 = vld [vmem:[%s2] sm:$0x1]
  %v120 = vperm.slane %v118, 0
  %122 = vmatpush.msra.mxu0 %v117
  %123 = vmatpush.msra.mxu0 %v116
  %124 = vmatpush.msra.mxu0 %v115
  %125 = vmatpush.msra.mxu0 %v114
  %126 = vmatpush.msra.mxu0 %v113
  %127 = vmatpush.msra.mxu0 %v112
  %128 = vmatpush.msra.mxu0 %v111
  %129 = vmatpush.msra.mxu0 %v110
  %130 = vmatpush.msra.mxu0 %v109
  %131 = vmatpush.msra.mxu0 %v108
  %132 = vmatpush.msra.mxu0 %v107
  %133 = vmatpush.msra.mxu0 %v106
  %134 = vmatpush.msra.mxu0 %v105
  %135 = vmatpush.msra.mxu0 %v104
  %136 = vmatpush.msra.mxu0 %v103
  %137 = vmatpush.msra.mxu0 %v102
  %138 = vmatmul.f32.gmra.mxu0 %v86
  %v139 = vpop.f32.mrf.mxu0
  %v140 = vadd.f32 %v120, %v139
  %141 = vmatmul.f32.gmra.mxu0 %v87
  %v142 = vpop.f32.mrf.mxu0
  %v143 = vadd.f32 %v120, %v142
  %144 = vmatmul.f32.gmra.mxu0 %v88
  %v145 = vpop.f32.mrf.mxu0
  %v146 = vadd.f32 %v120, %v145
  %147 = vmatmul.f32.gmra.mxu0 %v89
  %v148 = vpop.f32.mrf.mxu0
  %v149 = vadd.f32 %v120, %v148
  %150 = vmatmul.f32.gmra.mxu0 %v90
  %v151 = vpop.f32.mrf.mxu0
  %v152 = vadd.f32 %v120, %v151
  %153 = vmatmul.f32.gmra.mxu0 %v91
  %v154 = vpop.f32.mrf.mxu0
  %v155 = vadd.f32 %v120, %v154
  %156 = vmatmul.f32.gmra.mxu0 %v92
  %v157 = vpop.f32.mrf.mxu0
  %v158 = vadd.f32 %v120, %v157
  %159 = vmatmul.f32.gmra.mxu0 %v93
  %v160 = vpop.f32.mrf.mxu0
  %v161 = vadd.f32 %v120, %v160
  %162 = vmatmul.f32.gmra.mxu0 %v94
  %v163 = vpop.f32.mrf.mxu0
  %v164 = vadd.f32 %v120, %v163
  %165 = vmatmul.f32.gmra.mxu0 %v95
  %v166 = vpop.f32.mrf.mxu0
  %v167 = vadd.f32 %v120, %v166
  %168 = vmatmul.f32.gmra.mxu0 %v96
  %v169 = vpop.f32.mrf.mxu0
  %v170 = vadd.f32 %v120, %v169
  %171 = vmatmul.f32.gmra.mxu0 %v97
  %v172 = vpop.f32.mrf.mxu0
  %v173 = vadd.f32 %v120, %v172
  %174 = vmatmul.f32.gmra.mxu0 %v98
  %v175 = vpop.f32.mrf.mxu0
  %v176 = vadd.f32 %v120, %v175
  %177 = vmatmul.f32.gmra.mxu0 %v99
  %v178 = vpop.f32.mrf.mxu0
  %v179 = vadd.f32 %v120, %v178
  %180 = vmatmul.f32.gmra.mxu0 %v100
  %v181 = vpop.f32.mrf.mxu0
  %v182 = vadd.f32 %v120, %v181
  %183 = vmatmul.f32.gmra.mxu0 %v101
  %v184 = vpop.f32.mrf.mxu0
  %v185 = vadd.f32 %v120, %v184
  %186 = vdwg.mxu0
  %v187 = vperm.slane %v60, 0
  %v188 = vperm.slane %v83, 0
  %v191 = vmul.f32 %v187, %v140
  %v192 = vmul.f32 %v187, %v143
  %v193 = vmul.f32 %v187, %v146
  %v194 = vmul.f32 %v187, %v149
  %v195 = vmul.f32 %v187, %v152
  %v196 = vmul.f32 %v187, %v155
  %v197 = vmul.f32 %v187, %v158
  %v198 = vmul.f32 %v187, %v161
  %v199 = vmul.f32 %v188, %v164
  %v200 = vmul.f32 %v188, %v167
  %v201 = vmul.f32 %v188, %v170
  %v202 = vmul.f32 %v188, %v173
  %v203 = vmul.f32 %v188, %v176
  %v204 = vmul.f32 %v188, %v179
  %v205 = vmul.f32 %v188, %v182
  %v206 = vmul.f32 %v188, %v185
  %v207 = vperm.slane %v80, 0
  %v208 = vperm.slane %v85, 0
  %v211 = vadd.f32 %v191, %v207
  %v212 = vadd.f32 %v192, %v207
  %v213 = vadd.f32 %v193, %v207
  %v214 = vadd.f32 %v194, %v207
  %v215 = vadd.f32 %v195, %v207
  %v216 = vadd.f32 %v196, %v207
  %v217 = vadd.f32 %v197, %v207
  %v218 = vadd.f32 %v198, %v207
  %v219 = vadd.f32 %v199, %v208
  %v220 = vadd.f32 %v200, %v208
  %v221 = vadd.f32 %v201, %v208
  %v222 = vadd.f32 %v202, %v208
  %v223 = vadd.f32 %v203, %v208
  %v224 = vadd.f32 %v204, %v208
  %v225 = vadd.f32 %v205, %v208
  %v226 = vadd.f32 %v206, %v208
  %v227 = vmax.f32 %v211, 0.0
  %v228 = vmax.f32 %v212, 0.0
  %v229 = vmax.f32 %v213, 0.0
  %v230 = vmax.f32 %v214, 0.0
  %v231 = vmax.f32 %v215, 0.0
  %v232 = vmax.f32 %v216, 0.0
  %v233 = vmax.f32 %v217, 0.0
  %v234 = vmax.f32 %v218, 0.0
  %v235 = vmax.f32 %v219, 0.0
  %v236 = vmax.f32 %v220, 0.0
  %v237 = vmax.f32 %v221, 0.0
  %v238 = vmax.f32 %v222, 0.0
  %v239 = vmax.f32 %v223, 0.0
  %v240 = vmax.f32 %v224, 0.0
  %v241 = vmax.f32 %v225, 0.0
  %v242 = vmax.f32 %v226, 0.0
  %243 = vst [vmem:[%s6] sm:$0xff] %v227
  %244 = vst [vmem:[%s6 + $0x8] sm:$0xff] %v228
  %245 = vst [vmem:[%s6 + $0x10] sm:$0xff] %v229
  %246 = vst [vmem:[%s6 + $0x18] sm:$0xff] %v230
  %247 = vst [vmem:[%s6 + $0x20] sm:$0xff] %v231
  %248 = vst [vmem:[%s6 + $0x28] sm:$0xff] %v232
  %249 = vst [vmem:[%s6 + $0x30] sm:$0xff] %v233
  %250 = vst [vmem:[%s6 + $0x38] sm:$0xff] %v234
  %251 = vst [vmem:[%s6 + $0x40] sm:$0xff] %v235
  %252 = vst [vmem:[%s6 + $0x48] sm:$0xff] %v236
  %253 = vst [vmem:[%s6 + $0x50] sm:$0xff] %v237
  %254 = vst [vmem:[%s6 + $0x58] sm:$0xff] %v238
  %255 = vst [vmem:[%s6 + $0x60] sm:$0xff] %v239
  %256 = vst [vmem:[%s6 + $0x68] sm:$0xff] %v240
  %257 = vst [vmem:[%s6 + $0x70] sm:$0xff] %v241
  %258 = vst [vmem:[%s6 + $0x78] sm:$0xff] %v242
  // Predicated region
  $region26: #{_lambda_.5} parent=0 // pred_check
    _
  $region27: #{_lambda_.5} parent=0 // pred_check_branch
    %260 = sbr.rel (0) target = $region29
  $region28: #{_lambda_.5} parent=0 // pred_region
    _
  $region29: #{_lambda_.5} parent=0 // pred_fallthru
    _
  // Predicated region
  $region30: #{_lambda_.5} parent=0 // pred_check
    _
  $region31: #{_lambda_.5} parent=0 // pred_check_branch
    %262 = sbr.rel (0) target = $region33
  $region32: #{_lambda_.5} parent=0 // pred_region
    _
  $region33: #{_lambda_.5} parent=0 // pred_fallthru
    _

// kernel: _lambda_.6
$region0: #{_lambda_.6}
  #allocation0 [shape = 'u32[]', space=smem, size = 0x4, offset = 0x4, fixed_abs, tag = 'smem constant byte address 0x4 - core index']
  #allocation1 [shape = 'u32[72,128]{1,0:T(1,128)}', space=vmem, size = 0x9000, scoped, tag = 'internal scratch']
  %s0 = inlined_call_operand.vmem [shape: f32[2,16,1152], index: 0, kind: input, shape index: {}]
  %s1 = inlined_call_operand.vmem [shape: f32[1152,128], index: 1, kind: input, shape index: {}]
  %s2 = inlined_call_operand.vmem [shape: f32[1,128], index: 2, kind: input, shape index: {}]
  %s3 = inlined_call_operand.vmem [shape: f32[2,32], index: 3, kind: input, shape index: {}]
  %s4 = inlined_call_operand.vmem [shape: f32[32,256], index: 4, kind: input, shape index: {}]
  %s5 = inlined_call_operand.vmem [shape: f32[1,256], index: 5, kind: input, shape index: {}]
  %s6 = inlined_call_operand.vmem [shape: f32[2,16,128], index: 6, kind: output, shape index: {}]
  %s7 = sld [smem:[#allocation0]]
  $region34: #{_lambda_.6} parent=0
    _
  %s9 = ssub.s32 1, %s7
  %s10 = scalar_select 0, %s9, %s7
  // Predicated region
  $region2: #{_lambda_.6} parent=0 // pred_check
    _
  $region3: #{_lambda_.6} parent=0 // pred_check_branch
    %12 = sbr.rel (0) target = $region5
  $region4: #{_lambda_.6} parent=0 // pred_region
    _
  $region5: #{_lambda_.6} parent=0 // pred_fallthru
    _
  // Predicated region
  $region6: #{_lambda_.6} parent=0 // pred_check
    _
  $region7: #{_lambda_.6} parent=0 // pred_check_branch
    %14 = sbr.rel (0) target = $region9
  $region8: #{_lambda_.6} parent=0 // pred_region
    _
  $region9: #{_lambda_.6} parent=0 // pred_fallthru
    _
  // Predicated region
  $region10: #{_lambda_.6} parent=0 // pred_check
    _
  $region11: #{_lambda_.6} parent=0 // pred_check_branch
    %16 = sbr.rel (0) target = $region13
  $region12: #{_lambda_.6} parent=0 // pred_region
    _
  $region13: #{_lambda_.6} parent=0 // pred_fallthru
    _
  // Predicated region
  $region14: #{_lambda_.6} parent=0 // pred_check
    _
  $region15: #{_lambda_.6} parent=0 // pred_check_branch
    %18 = sbr.rel (0) target = $region17
  $region16: #{_lambda_.6} parent=0 // pred_region
    _
  $region17: #{_lambda_.6} parent=0 // pred_fallthru
    _
  // Predicated region
  $region18: #{_lambda_.6} parent=0 // pred_check
    _
  $region19: #{_lambda_.6} parent=0 // pred_check_branch
    %20 = sbr.rel (0) target = $region21
  $region20: #{_lambda_.6} parent=0 // pred_region
    _
  $region21: #{_lambda_.6} parent=0 // pred_fallthru
    _
  // Predicated region
  $region22: #{_lambda_.6} parent=0 // pred_check
    _
  $region23: #{_lambda_.6} parent=0 // pred_check_branch
    %22 = sbr.rel (0) target = $region25
  $region24: #{_lambda_.6} parent=0 // pred_region
    _
  $region25: #{_lambda_.6} parent=0 // pred_fallthru
    _
  %v23 = vld [vmem:[%s3] sm:$0x3]
  %v24 = vld [vmem:[%s4] sm:$0xff]
  %v25 = vld [vmem:[%s4 + $0x8] sm:$0xff]
  %v26 = vld [vmem:[%s4 + $0x10] sm:$0xff]
  %v27 = vld [vmem:[%s4 + $0x18] sm:$0xff]
  %v28 = vld [vmem:[%s4 + $0x20] sm:$0xff]
  %v29 = vld [vmem:[%s4 + $0x28] sm:$0xff]
  %v30 = vld [vmem:[%s4 + $0x30] sm:$0xff]
  %v31 = vld [vmem:[%s4 + $0x38] sm:$0xff]
  %v32 = vld [vmem:[%s5] sm:$0x3]
  %v34 = vperm.slane %v32, 0
  %v35 = vperm.slane %v32, 1
  %vm38 = vcmask 261120
  %v40 = vsel %vm38, %v23, 0
  %42 = vmatpush.msra.mxu0 0.0
  %43 = vmatpush.msra.mxu0 0.0
  %44 = vmatpush.msra.mxu0 0.0
  %45 = vmatpush.msra.mxu0 0.0
  %46 = vmatpush.msra.mxu0 0.0
  %47 = vmatpush.msra.mxu0 0.0
  %48 = vmatpush.msra.mxu0 0.0
  %49 = vmatpush.msra.mxu0 0.0
  %50 = vmatpush.msra.mxu0 0.0
  %51 = vmatpush.msra.mxu0 0.0
  %52 = vmatpush.msra.mxu0 0.0
  %53 = vmatpush.msra.mxu0 0.0
  %54 = vmatpush.msra.mxu0 %v30
  %55 = vmatpush.msra.mxu0 %v28
  %56 = vmatpush.msra.mxu0 %v26
  %57 = vmatpush.msra.mxu0 %v24
  %58 = vmatmul.f32.gmra.mxu0 %v40
  %v59 = vpop.f32.mrf.mxu0
  %v60 = vadd.f32 %v34, %v59
  %61 = vdwg.mxu0
  %62 = vmatpush.msra.mxu0 0.0
  %63 = vmatpush.msra.mxu0 0.0
  %64 = vmatpush.msra.mxu0 0.0
  %65 = vmatpush.msra.mxu0 0.0
  %66 = vmatpush.msra.mxu0 0.0
  %67 = vmatpush.msra.mxu0 0.0
  %68 = vmatpush.msra.mxu0 0.0
  %69 = vmatpush.msra.mxu0 0.0
  %70 = vmatpush.msra.mxu0 0.0
  %71 = vmatpush.msra.mxu0 0.0
  %72 = vmatpush.msra.mxu0 0.0
  %73 = vmatpush.msra.mxu0 0.0
  %74 = vmatpush.msra.mxu0 %v31
  %75 = vmatpush.msra.mxu0 %v29
  %76 = vmatpush.msra.mxu0 %v27
  %77 = vmatpush.msra.mxu0 %v25
  %78 = vmatmul.f32.gmra.mxu0 %v40
  %v79 = vpop.f32.mrf.mxu0
  %v80 = vadd.f32 %v35, %v79
  %81 = vdwg.mxu0
  %v83 = vrot.slane %v60, 1
  %v85 = vrot.slane %v80, 1
  %v86 = vld [vmem:[%s0] sm:$0xff]
  %v87 = vld [vmem:[%s0 + $0x8] sm:$0xff]
  %v88 = vld [vmem:[%s0 + $0x10] sm:$0xff]
  %v89 = vld [vmem:[%s0 + $0x18] sm:$0xff]
  %v90 = vld [vmem:[%s0 + $0x20] sm:$0xff]
  %v91 = vld [vmem:[%s0 + $0x28] sm:$0xff]
  %v92 = vld [vmem:[%s0 + $0x30] sm:$0xff]
  %v93 = vld [vmem:[%s0 + $0x38] sm:$0xff]
  %v94 = vld [vmem:[%s0 + $0x40] sm:$0xff]
  %v95 = vld [vmem:[%s0 + $0x48] sm:$0xff]
  %v96 = vld [vmem:[%s0 + $0x50] sm:$0xff]
  %v97 = vld [vmem:[%s0 + $0x58] sm:$0xff]
  %v98 = vld [vmem:[%s0 + $0x60] sm:$0xff]
  %v99 = vld [vmem:[%s0 + $0x68] sm:$0xff]
  %v100 = vld [vmem:[%s0 + $0x70] sm:$0xff]
  %v101 = vld [vmem:[%s0 + $0x78] sm:$0xff]
  %v102 = vld [vmem:[%s0 + $0x80] sm:$0xff]
  %v103 = vld [vmem:[%s0 + $0x88] sm:$0xff]
  %v104 = vld [vmem:[%s0 + $0x90] sm:$0xff]
  %v105 = vld [vmem:[%s0 + $0x98] sm:$0xff]
  %v106 = vld [vmem:[%s0 + $0xa0] sm:$0xff]
  %v107 = vld [vmem:[%s0 + $0xa8] sm:$0xff]
  %v108 = vld [vmem:[%s0 + $0xb0] sm:$0xff]
  %v109 = vld [vmem:[%s0 + $0xb8] sm:$0xff]
  %v110 = vld [vmem:[%s0 + $0xc0] sm:$0xff]
  %v111 = vld [vmem:[%s0 + $0xc8] sm:$0xff]
  %v112 = vld [vmem:[%s0 + $0xd0] sm:$0xff]
  %v113 = vld [vmem:[%s0 + $0xd8] sm:$0xff]
  %v114 = vld [vmem:[%s0 + $0xe0] sm:$0xff]
  %v115 = vld [vmem:[%s0 + $0xe8] sm:$0xff]
  %v116 = vld [vmem:[%s0 + $0xf0] sm:$0xff]
  %v117 = vld [vmem:[%s0 + $0xf8] sm:$0xff]
  %v118 = vld [vmem:[%s0 + $0x100] sm:$0xff]
  %v119 = vld [vmem:[%s0 + $0x108] sm:$0xff]
  %v120 = vld [vmem:[%s0 + $0x110] sm:$0xff]
  %v121 = vld [vmem:[%s0 + $0x118] sm:$0xff]
  %v122 = vld [vmem:[%s1] sm:$0xff]
  %v123 = vld [vmem:[%s1 + $0x8] sm:$0xff]
  %v124 = vld [vmem:[%s1 + $0x10] sm:$0xff]
  %v125 = vld [vmem:[%s1 + $0x18] sm:$0xff]
  %v126 = vld [vmem:[%s1 + $0x20] sm:$0xff]
  %v127 = vld [vmem:[%s1 + $0x28] sm:$0xff]
  %v128 = vld [vmem:[%s1 + $0x30] sm:$0xff]
  %v129 = vld [vmem:[%s1 + $0x38] sm:$0xff]
  %v130 = vld [vmem:[%s1 + $0x40] sm:$0xff]
  %v131 = vld [vmem:[%s1 + $0x48] sm:$0xff]
  %v132 = vld [vmem:[%s1 + $0x50] sm:$0xff]
  %v133 = vld [vmem:[%s1 + $0x58] sm:$0xff]
  %v134 = vld [vmem:[%s1 + $0x60] sm:$0xff]
  %v135 = vld [vmem:[%s1 + $0x68] sm:$0xff]
  %v136 = vld [vmem:[%s1 + $0x70] sm:$0xff]
  %v137 = vld [vmem:[%s1 + $0x78] sm:$0xff]
  %v138 = vld [vmem:[%s1 + $0x80] sm:$0xff]
  %v139 = vld [vmem:[%s1 + $0x88] sm:$0xff]
  %v140 = vld [vmem:[%s1 + $0x90] sm:$0xff]
  %v141 = vld [vmem:[%s1 + $0x98] sm:$0xff]
  %v142 = vld [vmem:[%s1 + $0xa0] sm:$0xff]
  %v143 = vld [vmem:[%s1 + $0xa8] sm:$0xff]
  %v144 = vld [vmem:[%s1 + $0xb0] sm:$0xff]
  %v145 = vld [vmem:[%s1 + $0xb8] sm:$0xff]
  %v146 = vld [vmem:[%s1 + $0xc0] sm:$0xff]
  %v147 = vld [vmem:[%s1 + $0xc8] sm:$0xff]
  %v148 = vld [vmem:[%s1 + $0xd0] sm:$0xff]
  %v149 = vld [vmem:[%s1 + $0xd8] sm:$0xff]
  %v150 = vld [vmem:[%s1 + $0xe0] sm:$0xff]
  %v151 = vld [vmem:[%s1 + $0xe8] sm:$0xff]
  %v152 = vld [vmem:[%s1 + $0xf0] sm:$0xff]
  %v153 = vld [vmem:[%s1 + $0xf8] sm:$0xff]
  %v154 = vld [vmem:[%s1 + $0x100] sm:$0xff]
  %v155 = vld [vmem:[%s1 + $0x108] sm:$0xff]
  %v156 = vld [vmem:[%s1 + $0x110] sm:$0xff]
  %v157 = vld [vmem:[%s1 + $0x118] sm:$0xff]
  %v158 = vld [vmem:[%s1 + $0x120] sm:$0xff]
  %v159 = vld [vmem:[%s1 + $0x128] sm:$0xff]
  %v160 = vld [vmem:[%s1 + $0x130] sm:$0xff]
  %v161 = vld [vmem:[%s1 + $0x138] sm:$0xff]
  %v162 = vld [vmem:[%s1 + $0x140] sm:$0xff]
  %v163 = vld [vmem:[%s1 + $0x148] sm:$0xff]
  %v164 = vld [vmem:[%s1 + $0x150] sm:$0xff]
  %v165 = vld [vmem:[%s1 + $0x158] sm:$0xff]
  %v166 = vld [vmem:[%s1 + $0x160] sm:$0xff]
  %v167 = vld [vmem:[%s1 + $0x168] sm:$0xff]
  %v168 = vld [vmem:[%s1 + $0x170] sm:$0xff]
  %v169 = vld [vmem:[%s1 + $0x178] sm:$0xff]
  %v170 = vld [vmem:[%s1 + $0x180] sm:$0xff]
  %v171 = vld [vmem:[%s1 + $0x188] sm:$0xff]
  %v172 = vld [vmem:[%s1 + $0x190] sm:$0xff]
  %v173 = vld [vmem:[%s1 + $0x198] sm:$0xff]
  %v174 = vld [vmem:[%s1 + $0x1a0] sm:$0xff]
  %v175 = vld [vmem:[%s1 + $0x1a8] sm:$0xff]
  %v176 = vld [vmem:[%s1 + $0x1b0] sm:$0xff]
  %v177 = vld [vmem:[%s1 + $0x1b8] sm:$0xff]
  %v178 = vld [vmem:[%s1 + $0x1c0] sm:$0xff]
  %v179 = vld [vmem:[%s1 + $0x1c8] sm:$0xff]
  %v180 = vld [vmem:[%s1 + $0x1d0] sm:$0xff]
  %v181 = vld [vmem:[%s1 + $0x1d8] sm:$0xff]
  %v182 = vld [vmem:[%s1 + $0x1e0] sm:$0xff]
  %v183 = vld [vmem:[%s1 + $0x1e8] sm:$0xff]
  %v184 = vld [vmem:[%s1 + $0x1f0] sm:$0xff]
  %v185 = vld [vmem:[%s1 + $0x1f8] sm:$0xff]
  %v186 = vld [vmem:[%s1 + $0x200] sm:$0xff]
  %v187 = vld [vmem:[%s1 + $0x208] sm:$0xff]
  %v188 = vld [vmem:[%s1 + $0x210] sm:$0xff]
  %v189 = vld [vmem:[%s1 + $0x218] sm:$0xff]
  %v190 = vld [vmem:[%s1 + $0x220] sm:$0xff]
  %v191 = vld [vmem:[%s1 + $0x228] sm:$0xff]
  %v192 = vld [vmem:[%s1 + $0x230] sm:$0xff]
  %v193 = vld [vmem:[%s1 + $0x238] sm:$0xff]
  %v194 = vld [vmem:[%s1 + $0x240] sm:$0xff]
  %v195 = vld [vmem:[%s1 + $0x248] sm:$0xff]
  %v196 = vld [vmem:[%s1 + $0x250] sm:$0xff]
  %v197 = vld [vmem:[%s1 + $0x258] sm:$0xff]
  %v198 = vld [vmem:[%s1 + $0x260] sm:$0xff]
  %v199 = vld [vmem:[%s1 + $0x268] sm:$0xff]
  %v200 = vld [vmem:[%s1 + $0x270] sm:$0xff]
  %v201 = vld [vmem:[%s1 + $0x278] sm:$0xff]
  %v202 = vld [vmem:[%s1 + $0x280] sm:$0xff]
  %v203 = vld [vmem:[%s1 + $0x288] sm:$0xff]
  %v204 = vld [vmem:[%s1 + $0x290] sm:$0xff]
  %v205 = vld [vmem:[%s1 + $0x298] sm:$0xff]
  %v206 = vld [vmem:[%s1 + $0x2a0] sm:$0xff]
  %v207 = vld [vmem:[%s1 + $0x2a8] sm:$0xff]
  %v208 = vld [vmem:[%s1 + $0x2b0] sm:$0xff]
  %v209 = vld [vmem:[%s1 + $0x2b8] sm:$0xff]
  %v210 = vld [vmem:[%s1 + $0x2c0] sm:$0xff]
  %v211 = vld [vmem:[%s1 + $0x2c8] sm:$0xff]
  %v212 = vld [vmem:[%s1 + $0x2d0] sm:$0xff]
  %v213 = vld [vmem:[%s1 + $0x2d8] sm:$0xff]
  %v214 = vld [vmem:[%s1 + $0x2e0] sm:$0xff]
  %v215 = vld [vmem:[%s1 + $0x2e8] sm:$0xff]
  %v216 = vld [vmem:[%s1 + $0x2f0] sm:$0xff]
  %v217 = vld [vmem:[%s1 + $0x2f8] sm:$0xff]
  %v218 = vld [vmem:[%s1 + $0x300] sm:$0xff]
  %v219 = vld [vmem:[%s1 + $0x308] sm:$0xff]
  %v220 = vld [vmem:[%s1 + $0x310] sm:$0xff]
  %v221 = vld [vmem:[%s1 + $0x318] sm:$0xff]
  %v222 = vld [vmem:[%s1 + $0x320] sm:$0xff]
  %v223 = vld [vmem:[%s1 + $0x328] sm:$0xff]
  %v224 = vld [vmem:[%s1 + $0x330] sm:$0xff]
  %v225 = vld [vmem:[%s1 + $0x338] sm:$0xff]
  %v226 = vld [vmem:[%s1 + $0x340] sm:$0xff]
  %v227 = vld [vmem:[%s1 + $0x348] sm:$0xff]
  %v228 = vld [vmem:[%s1 + $0x350] sm:$0xff]
  %v229 = vld [vmem:[%s1 + $0x358] sm:$0xff]
  %v230 = vld [vmem:[%s1 + $0x360] sm:$0xff]
  %v231 = vld [vmem:[%s1 + $0x368] sm:$0xff]
  %v232 = vld [vmem:[%s1 + $0x370] sm:$0xff]
  %v233 = vld [vmem:[%s1 + $0x378] sm:$0xff]
  %v234 = vld [vmem:[%s1 + $0x380] sm:$0xff]
  %v235 = vld [vmem:[%s1 + $0x388] sm:$0xff]
  %v236 = vld [vmem:[%s1 + $0x390] sm:$0xff]
  %v237 = vld [vmem:[%s1 + $0x398] sm:$0xff]
  %v238 = vld [vmem:[%s1 + $0x3a0] sm:$0xff]
  %v239 = vld [vmem:[%s1 + $0x3a8] sm:$0xff]
  %v240 = vld [vmem:[%s1 + $0x3b0] sm:$0xff]
  %v241 = vld [vmem:[%s1 + $0x3b8] sm:$0xff]
  %v242 = vld [vmem:[%s1 + $0x3c0] sm:$0xff]
  %v243 = vld [vmem:[%s1 + $0x3c8] sm:$0xff]
  %v244 = vld [vmem:[%s1 + $0x3d0] sm:$0xff]
  %v245 = vld [vmem:[%s1 + $0x3d8] sm:$0xff]
  %v246 = vld [vmem:[%s1 + $0x3e0] sm:$0xff]
  %v247 = vld [vmem:[%s1 + $0x3e8] sm:$0xff]
  %v248 = vld [vmem:[%s1 + $0x3f0] sm:$0xff]
  %v249 = vld [vmem:[%s1 + $0x3f8] sm:$0xff]
  %v250 = vld [vmem:[%s1 + $0x400] sm:$0xff]
  %v251 = vld [vmem:[%s1 + $0x408] sm:$0xff]
  %v252 = vld [vmem:[%s1 + $0x410] sm:$0xff]
  %v253 = vld [vmem:[%s1 + $0x418] sm:$0xff]
  %v254 = vld [vmem:[%s1 + $0x420] sm:$0xff]
  %v255 = vld [vmem:[%s1 + $0x428] sm:$0xff]
  %v256 = vld [vmem:[%s1 + $0x430] sm:$0xff]
  %v257 = vld [vmem:[%s1 + $0x438] sm:$0xff]
  %v258 = vld [vmem:[%s1 + $0x440] sm:$0xff]
  %v259 = vld [vmem:[%s1 + $0x448] sm:$0xff]
  %v260 = vld [vmem:[%s1 + $0x450] sm:$0xff]
  %v261 = vld [vmem:[%s1 + $0x458] sm:$0xff]
  %v262 = vld [vmem:[%s1 + $0x460] sm:$0xff]
  %v263 = vld [vmem:[%s1 + $0x468] sm:$0xff]
  %v264 = vld [vmem:[%s1 + $0x470] sm:$0xff]
  %v265 = vld [vmem:[%s1 + $0x478] sm:$0xff]
  %v266 = vld [vmem:[%s2] sm:$0x1]
  %v268 = vperm.slane %v266, 0
  %270 = vmatpush.msra.mxu0 %v137
  %271 = vmatpush.msra.mxu0 %v136
  %272 = vmatpush.msra.mxu0 %v135
  %273 = vmatpush.msra.mxu0 %v134
  %274 = vmatpush.msra.mxu0 %v133
  %275 = vmatpush.msra.mxu0 %v132
  %276 = vmatpush.msra.mxu0 %v131
  %277 = vmatpush.msra.mxu0 %v130
  %278 = vmatpush.msra.mxu0 %v129
  %279 = vmatpush.msra.mxu0 %v128
  %280 = vmatpush.msra.mxu0 %v127
  %281 = vmatpush.msra.mxu0 %v126
  %282 = vmatpush.msra.mxu0 %v125
  %283 = vmatpush.msra.mxu0 %v124
  %284 = vmatpush.msra.mxu0 %v123
  %285 = vmatpush.msra.mxu0 %v122
  %286 = vmatmul.f32.gmra.mxu0 %v86
  %v287 = vpop.f32.mrf.mxu0
  %v288 = vadd.f32 %v268, %v287
  %289 = vmatmul.f32.gmra.mxu0 %v95
  %v290 = vpop.f32.mrf.mxu0
  %v291 = vadd.f32 %v268, %v290
  %292 = vmatmul.f32.gmra.mxu0 %v104
  %v293 = vpop.f32.mrf.mxu0
  %v294 = vadd.f32 %v268, %v293
  %295 = vmatmul.f32.gmra.mxu0 %v113
  %v296 = vpop.f32.mrf.mxu0
  %v297 = vadd.f32 %v268, %v296
  %298 = vdwg.mxu0
  %299 = vmatpush.msra.mxu0 %v153
  %300 = vmatpush.msra.mxu0 %v152
  %301 = vmatpush.msra.mxu0 %v151
  %302 = vmatpush.msra.mxu0 %v150
  %303 = vmatpush.msra.mxu0 %v149
  %304 = vmatpush.msra.mxu0 %v148
  %305 = vmatpush.msra.mxu0 %v147
  %306 = vmatpush.msra.mxu0 %v146
  %307 = vmatpush.msra.mxu0 %v145
  %308 = vmatpush.msra.mxu0 %v144
  %309 = vmatpush.msra.mxu0 %v143
  %310 = vmatpush.msra.mxu0 %v142
  %311 = vmatpush.msra.mxu0 %v141
  %312 = vmatpush.msra.mxu0 %v140
  %313 = vmatpush.msra.mxu0 %v139
  %314 = vmatpush.msra.mxu0 %v138
  %315 = vmatmul.f32.gmra.mxu0 %v87
  %v316 = vpop.f32.mrf.mxu0
  %v317 = vadd.f32 %v288, %v316
  %318 = vmatmul.f32.gmra.mxu0 %v96
  %v319 = vpop.f32.mrf.mxu0
  %v320 = vadd.f32 %v291, %v319
  %321 = vmatmul.f32.gmra.mxu0 %v105
  %v322 = vpop.f32.mrf.mxu0
  %v323 = vadd.f32 %v294, %v322
  %324 = vmatmul.f32.gmra.mxu0 %v114
  %v325 = vpop.f32.mrf.mxu0
  %v326 = vadd.f32 %v297, %v325
  %327 = vdwg.mxu0
  %328 = vmatpush.msra.mxu0 %v169
  %329 = vmatpush.msra.mxu0 %v168
  %330 = vmatpush.msra.mxu0 %v167
  %331 = vmatpush.msra.mxu0 %v166
  %332 = vmatpush.msra.mxu0 %v165
  %333 = vmatpush.msra.mxu0 %v164
  %334 = vmatpush.msra.mxu0 %v163
  %335 = vmatpush.msra.mxu0 %v162
  %336 = vmatpush.msra.mxu0 %v161
  %337 = vmatpush.msra.mxu0 %v160
  %338 = vmatpush.msra.mxu0 %v159
  %339 = vmatpush.msra.mxu0 %v158
  %340 = vmatpush.msra.mxu0 %v157
  %341 = vmatpush.msra.mxu0 %v156
  %342 = vmatpush.msra.mxu0 %v155
  %343 = vmatpush.msra.mxu0 %v154
  %344 = vmatmul.f32.gmra.mxu0 %v88
  %v345 = vpop.f32.mrf.mxu0
  %v346 = vadd.f32 %v317, %v345
  %347 = vmatmul.f32.gmra.mxu0 %v97
  %v348 = vpop.f32.mrf.mxu0
  %v349 = vadd.f32 %v320, %v348
  %350 = vmatmul.f32.gmra.mxu0 %v106
  %v351 = vpop.f32.mrf.mxu0
  %v352 = vadd.f32 %v323, %v351
  %353 = vmatmul.f32.gmra.mxu0 %v115
  %v354 = vpop.f32.mrf.mxu0
  %v355 = vadd.f32 %v326, %v354
  %356 = vdwg.mxu0
  %357 = vmatpush.msra.mxu0 %v185
  %358 = vmatpush.msra.mxu0 %v184
  %359 = vmatpush.msra.mxu0 %v183
  %360 = vmatpush.msra.mxu0 %v182
  %361 = vmatpush.msra.mxu0 %v181
  %362 = vmatpush.msra.mxu0 %v180
  %363 = vmatpush.msra.mxu0 %v179
  %364 = vmatpush.msra.mxu0 %v178
  %365 = vmatpush.msra.mxu0 %v177
  %366 = vmatpush.msra.mxu0 %v176
  %367 = vmatpush.msra.mxu0 %v175
  %368 = vmatpush.msra.mxu0 %v174
  %369 = vmatpush.msra.mxu0 %v173
  %370 = vmatpush.msra.mxu0 %v172
  %371 = vmatpush.msra.mxu0 %v171
  %372 = vmatpush.msra.mxu0 %v170
  %373 = vmatmul.f32.gmra.mxu0 %v89
  %v374 = vpop.f32.mrf.mxu0
  %v375 = vadd.f32 %v346, %v374
  %376 = vmatmul.f32.gmra.mxu0 %v98
  %v377 = vpop.f32.mrf.mxu0
  %v378 = vadd.f32 %v349, %v377
  %379 = vmatmul.f32.gmra.mxu0 %v107
  %v380 = vpop.f32.mrf.mxu0
  %v381 = vadd.f32 %v352, %v380
  %382 = vmatmul.f32.gmra.mxu0 %v116
  %v383 = vpop.f32.mrf.mxu0
  %v384 = vadd.f32 %v355, %v383
  %385 = vdwg.mxu0
  %386 = vmatpush.msra.mxu0 %v201
  %387 = vmatpush.msra.mxu0 %v200
  %388 = vmatpush.msra.mxu0 %v199
  %389 = vmatpush.msra.mxu0 %v198
  %390 = vmatpush.msra.mxu0 %v197
  %391 = vmatpush.msra.mxu0 %v196
  %392 = vmatpush.msra.mxu0 %v195
  %393 = vmatpush.msra.mxu0 %v194
  %394 = vmatpush.msra.mxu0 %v193
  %395 = vmatpush.msra.mxu0 %v192
  %396 = vmatpush.msra.mxu0 %v191
  %397 = vmatpush.msra.mxu0 %v190
  %398 = vmatpush.msra.mxu0 %v189
  %399 = vmatpush.msra.mxu0 %v188
  %400 = vmatpush.msra.mxu0 %v187
  %401 = vmatpush.msra.mxu0 %v186
  %402 = vmatmul.f32.gmra.mxu0 %v90
  %v403 = vpop.f32.mrf.mxu0
  %v404 = vadd.f32 %v375, %v403
  %405 = vmatmul.f32.gmra.mxu0 %v99
  %v406 = vpop.f32.mrf.mxu0
  %v407 = vadd.f32 %v378, %v406
  %408 = vmatmul.f32.gmra.mxu0 %v108
  %v409 = vpop.f32.mrf.mxu0
  %v410 = vadd.f32 %v381, %v409
  %411 = vmatmul.f32.gmra.mxu0 %v117
  %v412 = vpop.f32.mrf.mxu0
  %v413 = vadd.f32 %v384, %v412
  %414 = vdwg.mxu0
  %415 = vmatpush.msra.mxu0 %v217
  %416 = vmatpush.msra.mxu0 %v216
  %417 = vmatpush.msra.mxu0 %v215
  %418 = vmatpush.msra.mxu0 %v214
  %419 = vmatpush.msra.mxu0 %v213
  %420 = vmatpush.msra.mxu0 %v212
  %421 = vmatpush.msra.mxu0 %v211
  %422 = vmatpush.msra.mxu0 %v210
  %423 = vmatpush.msra.mxu0 %v209
  %424 = vmatpush.msra.mxu0 %v208
  %425 = vmatpush.msra.mxu0 %v207
  %426 = vmatpush.msra.mxu0 %v206
  %427 = vmatpush.msra.mxu0 %v205
  %428 = vmatpush.msra.mxu0 %v204
  %429 = vmatpush.msra.mxu0 %v203
  %430 = vmatpush.msra.mxu0 %v202
  %431 = vmatmul.f32.gmra.mxu0 %v91
  %v432 = vpop.f32.mrf.mxu0
  %v433 = vadd.f32 %v404, %v432
  %434 = vmatmul.f32.gmra.mxu0 %v100
  %v435 = vpop.f32.mrf.mxu0
  %v436 = vadd.f32 %v407, %v435
  %437 = vmatmul.f32.gmra.mxu0 %v109
  %v438 = vpop.f32.mrf.mxu0
  %v439 = vadd.f32 %v410, %v438
  %440 = vmatmul.f32.gmra.mxu0 %v118
  %v441 = vpop.f32.mrf.mxu0
  %v442 = vadd.f32 %v413, %v441
  %443 = vdwg.mxu0
  %444 = vmatpush.msra.mxu0 %v233
  %445 = vmatpush.msra.mxu0 %v232
  %446 = vmatpush.msra.mxu0 %v231
  %447 = vmatpush.msra.mxu0 %v230
  %448 = vmatpush.msra.mxu0 %v229
  %449 = vmatpush.msra.mxu0 %v228
  %450 = vmatpush.msra.mxu0 %v227
  %451 = vmatpush.msra.mxu0 %v226
  %452 = vmatpush.msra.mxu0 %v225
  %453 = vmatpush.msra.mxu0 %v224
  %454 = vmatpush.msra.mxu0 %v223
  %455 = vmatpush.msra.mxu0 %v222
  %456 = vmatpush.msra.mxu0 %v221
  %457 = vmatpush.msra.mxu0 %v220
  %458 = vmatpush.msra.mxu0 %v219
  %459 = vmatpush.msra.mxu0 %v218
  %460 = vmatmul.f32.gmra.mxu0 %v92
  %v461 = vpop.f32.mrf.mxu0
  %v462 = vadd.f32 %v433, %v461
  %463 = vmatmul.f32.gmra.mxu0 %v101
  %v464 = vpop.f32.mrf.mxu0
  %v465 = vadd.f32 %v436, %v464
  %466 = vmatmul.f32.gmra.mxu0 %v110
  %v467 = vpop.f32.mrf.mxu0
  %v468 = vadd.f32 %v439, %v467
  %469 = vmatmul.f32.gmra.mxu0 %v119
  %v470 = vpop.f32.mrf.mxu0
  %v471 = vadd.f32 %v442, %v470
  %472 = vdwg.mxu0
  %473 = vmatpush.msra.mxu0 %v249
  %474 = vmatpush.msra.mxu0 %v248
  %475 = vmatpush.msra.mxu0 %v247
  %476 = vmatpush.msra.mxu0 %v246
  %477 = vmatpush.msra.mxu0 %v245
  %478 = vmatpush.msra.mxu0 %v244
  %479 = vmatpush.msra.mxu0 %v243
  %480 = vmatpush.msra.mxu0 %v242
  %481 = vmatpush.msra.mxu0 %v241
  %482 = vmatpush.msra.mxu0 %v240
  %483 = vmatpush.msra.mxu0 %v239
  %484 = vmatpush.msra.mxu0 %v238
  %485 = vmatpush.msra.mxu0 %v237
  %486 = vmatpush.msra.mxu0 %v236
  %487 = vmatpush.msra.mxu0 %v235
  %488 = vmatpush.msra.mxu0 %v234
  %489 = vmatmul.f32.gmra.mxu0 %v93
  %v490 = vpop.f32.mrf.mxu0
  %v491 = vadd.f32 %v462, %v490
  %492 = vmatmul.f32.gmra.mxu0 %v102
  %v493 = vpop.f32.mrf.mxu0
  %v494 = vadd.f32 %v465, %v493
  %495 = vmatmul.f32.gmra.mxu0 %v111
  %v496 = vpop.f32.mrf.mxu0
  %v497 = vadd.f32 %v468, %v496
  %498 = vmatmul.f32.gmra.mxu0 %v120
  %v499 = vpop.f32.mrf.mxu0
  %v500 = vadd.f32 %v471, %v499
  %501 = vdwg.mxu0
  %502 = vmatpush.msra.mxu0 %v265
  %503 = vmatpush.msra.mxu0 %v264
  %504 = vmatpush.msra.mxu0 %v263
  %505 = vmatpush.msra.mxu0 %v262
  %506 = vmatpush.msra.mxu0 %v261
  %507 = vmatpush.msra.mxu0 %v260
  %508 = vmatpush.msra.mxu0 %v259
  %509 = vmatpush.msra.mxu0 %v258
  %510 = vmatpush.msra.mxu0 %v257
  %511 = vmatpush.msra.mxu0 %v256
  %512 = vmatpush.msra.mxu0 %v255
  %513 = vmatpush.msra.mxu0 %v254
  %514 = vmatpush.msra.mxu0 %v253
  %515 = vmatpush.msra.mxu0 %v252
  %516 = vmatpush.msra.mxu0 %v251
  %517 = vmatpush.msra.mxu0 %v250
  %518 = vmatmul.f32.gmra.mxu0 %v94
  %v519 = vpop.f32.mrf.mxu0
  %v520 = vadd.f32 %v491, %v519
  %521 = vmatmul.f32.gmra.mxu0 %v103
  %v522 = vpop.f32.mrf.mxu0
  %v523 = vadd.f32 %v494, %v522
  %524 = vmatmul.f32.gmra.mxu0 %v112
  %v525 = vpop.f32.mrf.mxu0
  %v526 = vadd.f32 %v497, %v525
  %527 = vmatmul.f32.gmra.mxu0 %v121
  %v528 = vpop.f32.mrf.mxu0
  %v529 = vadd.f32 %v500, %v528
  %530 = vdwg.mxu0
  %v531 = vperm.slane %v60, 0
  %v532 = vperm.slane %v83, 0
  %v535 = vmul.f32 %v531, %v520
  %v536 = vmul.f32 %v531, %v523
  %v537 = vmul.f32 %v532, %v526
  %v538 = vmul.f32 %v532, %v529
  %v539 = vperm.slane %v80, 0
  %v540 = vperm.slane %v85, 0
  %v543 = vadd.f32 %v535, %v539
  %v544 = vadd.f32 %v536, %v539
  %v545 = vadd.f32 %v537, %v540
  %v546 = vadd.f32 %v538, %v540
  %v547 = vmax.f32 %v543, 0.0
  %v548 = vmax.f32 %v544, 0.0
  %v549 = vmax.f32 %v545, 0.0
  %v550 = vmax.f32 %v546, 0.0
  %551 = vst [vmem:[%s6] sm:$0xff] %v547
  %552 = vst [vmem:[%s6 + $0x8] sm:$0xff] %v548
  %553 = vst [vmem:[%s6 + $0x10] sm:$0xff] %v549
  %554 = vst [vmem:[%s6 + $0x18] sm:$0xff] %v550
  // Predicated region
  $region26: #{_lambda_.6} parent=0 // pred_check
    _
  $region27: #{_lambda_.6} parent=0 // pred_check_branch
    %556 = sbr.rel (0) target = $region29
  $region28: #{_lambda_.6} parent=0 // pred_region
    _
  $region29: #{_lambda_.6} parent=0 // pred_fallthru
    _
  // Predicated region
  $region30: #{_lambda_.6} parent=0 // pred_check
    _
  $region31: #{_lambda_.6} parent=0 // pred_check_branch
    %558 = sbr.rel (0) target = $region33
  $region32: #{_lambda_.6} parent=0 // pred_region
    _
  $region33: #{_lambda_.6} parent=0 // pred_fallthru
    _

// kernel: _lambda_.7
$region0: #{_lambda_.7}
  #allocation0 [shape = 'u32[]', space=smem, size = 0x4, offset = 0x4, fixed_abs, tag = 'smem constant byte address 0x4 - core index']
  #allocation1 [shape = 'u32[72,128]{1,0:T(1,128)}', space=vmem, size = 0x9000, scoped, tag = 'internal scratch']
  %s0 = inlined_call_operand.vmem [shape: f32[2,2048], index: 0, kind: input, shape index: {}]
  %s1 = inlined_call_operand.vmem [shape: f32[2,32], index: 1, kind: input, shape index: {}]
  %s2 = inlined_call_operand.vmem [shape: f32[2048,32], index: 2, kind: input, shape index: {}]
  %s3 = inlined_call_operand.vmem [shape: f32[32,32], index: 3, kind: input, shape index: {}]
  %s4 = inlined_call_operand.vmem [shape: f32[1,32], index: 4, kind: input, shape index: {}]
  %s5 = inlined_call_operand.vmem [shape: f32[32,8], index: 5, kind: input, shape index: {}]
  %s6 = inlined_call_operand.vmem [shape: f32[1,8], index: 6, kind: input, shape index: {}]
  %s7 = inlined_call_operand.hbm [shape: f32[2,8], index: 7, kind: output, shape index: {}]
  %s8 = sld [smem:[#allocation0]]
  $region38: #{_lambda_.7} parent=0
    _
  %s10 = ssub.s32 1, %s8
  %s11 = scalar_select 0, %s10, %s8
  $region1: #{_lambda_.7} parent=0
    #allocation2 [shape = 'u8[1024]{0}', space=vmem, size = 0x400, scoped, tag = 'output window, operand 0, single buffered']
    #allocation3 [shape = 's32[1]{0}', space=sflag, size = 0x4, scoped, tag = 'scoped memory for _lambda_.7']
    %12 = vsyncpa [#allocation3], 0
    // Predicated region
    $region2: #{_lambda_.7} parent=1 // pred_check
      _
    $region3: #{_lambda_.7} parent=1 // pred_check_branch
      %14 = sbr.rel (0) target = $region5
    $region4: #{_lambda_.7} parent=1 // pred_region
      _
    $region5: #{_lambda_.7} parent=1 // pred_fallthru
      _
    // Predicated region
    $region6: #{_lambda_.7} parent=1 // pred_check
      _
    $region7: #{_lambda_.7} parent=1 // pred_check_branch
      %16 = sbr.rel (0) target = $region9
    $region8: #{_lambda_.7} parent=1 // pred_region
      _
    $region9: #{_lambda_.7} parent=1 // pred_fallthru
      _
    // Predicated region
    $region10: #{_lambda_.7} parent=1 // pred_check
      _
    $region11: #{_lambda_.7} parent=1 // pred_check_branch
      %18 = sbr.rel (0) target = $region13
    $region12: #{_lambda_.7} parent=1 // pred_region
      _
    $region13: #{_lambda_.7} parent=1 // pred_fallthru
      _
    // Predicated region
    $region14: #{_lambda_.7} parent=1 // pred_check
      _
    $region15: #{_lambda_.7} parent=1 // pred_check_branch
      %20 = sbr.rel (0) target = $region17
    $region16: #{_lambda_.7} parent=1 // pred_region
      _
    $region17: #{_lambda_.7} parent=1 // pred_fallthru
      _
    // Predicated region
    $region18: #{_lambda_.7} parent=1 // pred_check
      _
    $region19: #{_lambda_.7} parent=1 // pred_check_branch
      %22 = sbr.rel (0) target = $region21
    $region20: #{_lambda_.7} parent=1 // pred_region
      _
    $region21: #{_lambda_.7} parent=1 // pred_fallthru
      _
    // Predicated region
    $region22: #{_lambda_.7} parent=1 // pred_check
      _
    $region23: #{_lambda_.7} parent=1 // pred_check_branch
      %24 = sbr.rel (0) target = $region25
    $region24: #{_lambda_.7} parent=1 // pred_region
      _
    $region25: #{_lambda_.7} parent=1 // pred_fallthru
      _
    // Predicated region
    $region26: #{_lambda_.7} parent=1 // pred_check
      _
    $region27: #{_lambda_.7} parent=1 // pred_check_branch
      %26 = sbr.rel (0) target = $region29
    $region28: #{_lambda_.7} parent=1 // pred_region
      _
    $region29: #{_lambda_.7} parent=1 // pred_fallthru
      _
    %v27 = vld [vmem:[%s0] sm:$0xff]
    %v28 = vld [vmem:[%s0 + $0x8] sm:$0xff]
    %v29 = vld [vmem:[%s0 + $0x10] sm:$0xff]
    %v30 = vld [vmem:[%s0 + $0x18] sm:$0xff]
    %v31 = vld [vmem:[%s2] sm:$0xff]
    %v32 = vld [vmem:[%s2 + $0x8] sm:$0xff]
    %v33 = vld [vmem:[%s2 + $0x10] sm:$0xff]
    %v34 = vld [vmem:[%s2 + $0x18] sm:$0xff]
    %v35 = vld [vmem:[%s2 + $0x20] sm:$0xff]
    %v36 = vld [vmem:[%s2 + $0x28] sm:$0xff]
    %v37 = vld [vmem:[%s2 + $0x30] sm:$0xff]
    %v38 = vld [vmem:[%s2 + $0x38] sm:$0xff]
    %v39 = vld [vmem:[%s2 + $0x40] sm:$0xff]
    %v40 = vld [vmem:[%s2 + $0x48] sm:$0xff]
    %v41 = vld [vmem:[%s2 + $0x50] sm:$0xff]
    %v42 = vld [vmem:[%s2 + $0x58] sm:$0xff]
    %v43 = vld [vmem:[%s2 + $0x60] sm:$0xff]
    %v44 = vld [vmem:[%s2 + $0x68] sm:$0xff]
    %v45 = vld [vmem:[%s2 + $0x70] sm:$0xff]
    %v46 = vld [vmem:[%s2 + $0x78] sm:$0xff]
    %v47 = vld [vmem:[%s2 + $0x80] sm:$0xff]
    %v48 = vld [vmem:[%s2 + $0x88] sm:$0xff]
    %v49 = vld [vmem:[%s2 + $0x90] sm:$0xff]
    %v50 = vld [vmem:[%s2 + $0x98] sm:$0xff]
    %v51 = vld [vmem:[%s2 + $0xa0] sm:$0xff]
    %v52 = vld [vmem:[%s2 + $0xa8] sm:$0xff]
    %v53 = vld [vmem:[%s2 + $0xb0] sm:$0xff]
    %v54 = vld [vmem:[%s2 + $0xb8] sm:$0xff]
    %v55 = vld [vmem:[%s2 + $0xc0] sm:$0xff]
    %v56 = vld [vmem:[%s2 + $0xc8] sm:$0xff]
    %v57 = vld [vmem:[%s2 + $0xd0] sm:$0xff]
    %v58 = vld [vmem:[%s2 + $0xd8] sm:$0xff]
    %v59 = vld [vmem:[%s2 + $0xe0] sm:$0xff]
    %v60 = vld [vmem:[%s2 + $0xe8] sm:$0xff]
    %v61 = vld [vmem:[%s2 + $0xf0] sm:$0xff]
    %v62 = vld [vmem:[%s2 + $0xf8] sm:$0xff]
    %v63 = vld [vmem:[%s2 + $0x100] sm:$0xff]
    %v64 = vld [vmem:[%s2 + $0x108] sm:$0xff]
    %v65 = vld [vmem:[%s2 + $0x110] sm:$0xff]
    %v66 = vld [vmem:[%s2 + $0x118] sm:$0xff]
    %v67 = vld [vmem:[%s2 + $0x120] sm:$0xff]
    %v68 = vld [vmem:[%s2 + $0x128] sm:$0xff]
    %v69 = vld [vmem:[%s2 + $0x130] sm:$0xff]
    %v70 = vld [vmem:[%s2 + $0x138] sm:$0xff]
    %v71 = vld [vmem:[%s2 + $0x140] sm:$0xff]
    %v72 = vld [vmem:[%s2 + $0x148] sm:$0xff]
    %v73 = vld [vmem:[%s2 + $0x150] sm:$0xff]
    %v74 = vld [vmem:[%s2 + $0x158] sm:$0xff]
    %v75 = vld [vmem:[%s2 + $0x160] sm:$0xff]
    %v76 = vld [vmem:[%s2 + $0x168] sm:$0xff]
    %v77 = vld [vmem:[%s2 + $0x170] sm:$0xff]
    %v78 = vld [vmem:[%s2 + $0x178] sm:$0xff]
    %v79 = vld [vmem:[%s2 + $0x180] sm:$0xff]
    %v80 = vld [vmem:[%s2 + $0x188] sm:$0xff]
    %v81 = vld [vmem:[%s2 + $0x190] sm:$0xff]
    %v82 = vld [vmem:[%s2 + $0x198] sm:$0xff]
    %v83 = vld [vmem:[%s2 + $0x1a0] sm:$0xff]
    %v84 = vld [vmem:[%s2 + $0x1a8] sm:$0xff]
    %v85 = vld [vmem:[%s2 + $0x1b0] sm:$0xff]
    %v86 = vld [vmem:[%s2 + $0x1b8] sm:$0xff]
    %v87 = vld [vmem:[%s2 + $0x1c0] sm:$0xff]
    %v88 = vld [vmem:[%s2 + $0x1c8] sm:$0xff]
    %v89 = vld [vmem:[%s2 + $0x1d0] sm:$0xff]
    %v90 = vld [vmem:[%s2 + $0x1d8] sm:$0xff]
    %v91 = vld [vmem:[%s2 + $0x1e0] sm:$0xff]
    %v92 = vld [vmem:[%s2 + $0x1e8] sm:$0xff]
    %v93 = vld [vmem:[%s2 + $0x1f0] sm:$0xff]
    %v94 = vld [vmem:[%s2 + $0x1f8] sm:$0xff]
    %v95 = vld [vmem:[%s2 + $0x200] sm:$0xff]
    %v96 = vld [vmem:[%s2 + $0x208] sm:$0xff]
    %v97 = vld [vmem:[%s2 + $0x210] sm:$0xff]
    %v98 = vld [vmem:[%s2 + $0x218] sm:$0xff]
    %v99 = vld [vmem:[%s2 + $0x220] sm:$0xff]
    %v100 = vld [vmem:[%s2 + $0x228] sm:$0xff]
    %v101 = vld [vmem:[%s2 + $0x230] sm:$0xff]
    %v102 = vld [vmem:[%s2 + $0x238] sm:$0xff]
    %v103 = vld [vmem:[%s2 + $0x240] sm:$0xff]
    %v104 = vld [vmem:[%s2 + $0x248] sm:$0xff]
    %v105 = vld [vmem:[%s2 + $0x250] sm:$0xff]
    %v106 = vld [vmem:[%s2 + $0x258] sm:$0xff]
    %v107 = vld [vmem:[%s2 + $0x260] sm:$0xff]
    %v108 = vld [vmem:[%s2 + $0x268] sm:$0xff]
    %v109 = vld [vmem:[%s2 + $0x270] sm:$0xff]
    %v110 = vld [vmem:[%s2 + $0x278] sm:$0xff]
    %v111 = vld [vmem:[%s2 + $0x280] sm:$0xff]
    %v112 = vld [vmem:[%s2 + $0x288] sm:$0xff]
    %v113 = vld [vmem:[%s2 + $0x290] sm:$0xff]
    %v114 = vld [vmem:[%s2 + $0x298] sm:$0xff]
    %v115 = vld [vmem:[%s2 + $0x2a0] sm:$0xff]
    %v116 = vld [vmem:[%s2 + $0x2a8] sm:$0xff]
    %v117 = vld [vmem:[%s2 + $0x2b0] sm:$0xff]
    %v118 = vld [vmem:[%s2 + $0x2b8] sm:$0xff]
    %v119 = vld [vmem:[%s2 + $0x2c0] sm:$0xff]
    %v120 = vld [vmem:[%s2 + $0x2c8] sm:$0xff]
    %v121 = vld [vmem:[%s2 + $0x2d0] sm:$0xff]
    %v122 = vld [vmem:[%s2 + $0x2d8] sm:$0xff]
    %v123 = vld [vmem:[%s2 + $0x2e0] sm:$0xff]
    %v124 = vld [vmem:[%s2 + $0x2e8] sm:$0xff]
    %v125 = vld [vmem:[%s2 + $0x2f0] sm:$0xff]
    %v126 = vld [vmem:[%s2 + $0x2f8] sm:$0xff]
    %v127 = vld [vmem:[%s2 + $0x300] sm:$0xff]
    %v128 = vld [vmem:[%s2 + $0x308] sm:$0xff]
    %v129 = vld [vmem:[%s2 + $0x310] sm:$0xff]
    %v130 = vld [vmem:[%s2 + $0x318] sm:$0xff]
    %v131 = vld [vmem:[%s2 + $0x320] sm:$0xff]
    %v132 = vld [vmem:[%s2 + $0x328] sm:$0xff]
    %v133 = vld [vmem:[%s2 + $0x330] sm:$0xff]
    %v134 = vld [vmem:[%s2 + $0x338] sm:$0xff]
    %v135 = vld [vmem:[%s2 + $0x340] sm:$0xff]
    %v136 = vld [vmem:[%s2 + $0x348] sm:$0xff]
    %v137 = vld [vmem:[%s2 + $0x350] sm:$0xff]
    %v138 = vld [vmem:[%s2 + $0x358] sm:$0xff]
    %v139 = vld [vmem:[%s2 + $0x360] sm:$0xff]
    %v140 = vld [vmem:[%s2 + $0x368] sm:$0xff]
    %v141 = vld [vmem:[%s2 + $0x370] sm:$0xff]
    %v142 = vld [vmem:[%s2 + $0x378] sm:$0xff]
    %v143 = vld [vmem:[%s2 + $0x380] sm:$0xff]
    %v144 = vld [vmem:[%s2 + $0x388] sm:$0xff]
    %v145 = vld [vmem:[%s2 + $0x390] sm:$0xff]
    %v146 = vld [vmem:[%s2 + $0x398] sm:$0xff]
    %v147 = vld [vmem:[%s2 + $0x3a0] sm:$0xff]
    %v148 = vld [vmem:[%s2 + $0x3a8] sm:$0xff]
    %v149 = vld [vmem:[%s2 + $0x3b0] sm:$0xff]
    %v150 = vld [vmem:[%s2 + $0x3b8] sm:$0xff]
    %v151 = vld [vmem:[%s2 + $0x3c0] sm:$0xff]
    %v152 = vld [vmem:[%s2 + $0x3c8] sm:$0xff]
    %v153 = vld [vmem:[%s2 + $0x3d0] sm:$0xff]
    %v154 = vld [vmem:[%s2 + $0x3d8] sm:$0xff]
    %v155 = vld [vmem:[%s2 + $0x3e0] sm:$0xff]
    %v156 = vld [vmem:[%s2 + $0x3e8] sm:$0xff]
    %v157 = vld [vmem:[%s2 + $0x3f0] sm:$0xff]
    %v158 = vld [vmem:[%s2 + $0x3f8] sm:$0xff]
    %v159 = vld [vmem:[%s2 + $0x400] sm:$0xff]
    %v160 = vld [vmem:[%s2 + $0x408] sm:$0xff]
    %v161 = vld [vmem:[%s2 + $0x410] sm:$0xff]
    %v162 = vld [vmem:[%s2 + $0x418] sm:$0xff]
    %v163 = vld [vmem:[%s2 + $0x420] sm:$0xff]
    %v164 = vld [vmem:[%s2 + $0x428] sm:$0xff]
    %v165 = vld [vmem:[%s2 + $0x430] sm:$0xff]
    %v166 = vld [vmem:[%s2 + $0x438] sm:$0xff]
    %v167 = vld [vmem:[%s2 + $0x440] sm:$0xff]
    %v168 = vld [vmem:[%s2 + $0x448] sm:$0xff]
    %v169 = vld [vmem:[%s2 + $0x450] sm:$0xff]
    %v170 = vld [vmem:[%s2 + $0x458] sm:$0xff]
    %v171 = vld [vmem:[%s2 + $0x460] sm:$0xff]
    %v172 = vld [vmem:[%s2 + $0x468] sm:$0xff]
    %v173 = vld [vmem:[%s2 + $0x470] sm:$0xff]
    %v174 = vld [vmem:[%s2 + $0x478] sm:$0xff]
    %v175 = vld [vmem:[%s2 + $0x480] sm:$0xff]
    %v176 = vld [vmem:[%s2 + $0x488] sm:$0xff]
    %v177 = vld [vmem:[%s2 + $0x490] sm:$0xff]
    %v178 = vld [vmem:[%s2 + $0x498] sm:$0xff]
    %v179 = vld [vmem:[%s2 + $0x4a0] sm:$0xff]
    %v180 = vld [vmem:[%s2 + $0x4a8] sm:$0xff]
    %v181 = vld [vmem:[%s2 + $0x4b0] sm:$0xff]
    %v182 = vld [vmem:[%s2 + $0x4b8] sm:$0xff]
    %v183 = vld [vmem:[%s2 + $0x4c0] sm:$0xff]
    %v184 = vld [vmem:[%s2 + $0x4c8] sm:$0xff]
    %v185 = vld [vmem:[%s2 + $0x4d0] sm:$0xff]
    %v186 = vld [vmem:[%s2 + $0x4d8] sm:$0xff]
    %v187 = vld [vmem:[%s2 + $0x4e0] sm:$0xff]
    %v188 = vld [vmem:[%s2 + $0x4e8] sm:$0xff]
    %v189 = vld [vmem:[%s2 + $0x4f0] sm:$0xff]
    %v190 = vld [vmem:[%s2 + $0x4f8] sm:$0xff]
    %v191 = vld [vmem:[%s2 + $0x500] sm:$0xff]
    %v192 = vld [vmem:[%s2 + $0x508] sm:$0xff]
    %v193 = vld [vmem:[%s2 + $0x510] sm:$0xff]
    %v194 = vld [vmem:[%s2 + $0x518] sm:$0xff]
    %v195 = vld [vmem:[%s2 + $0x520] sm:$0xff]
    %v196 = vld [vmem:[%s2 + $0x528] sm:$0xff]
    %v197 = vld [vmem:[%s2 + $0x530] sm:$0xff]
    %v198 = vld [vmem:[%s2 + $0x538] sm:$0xff]
    %v199 = vld [vmem:[%s2 + $0x540] sm:$0xff]
    %v200 = vld [vmem:[%s2 + $0x548] sm:$0xff]
    %v201 = vld [vmem:[%s2 + $0x550] sm:$0xff]
    %v202 = vld [vmem:[%s2 + $0x558] sm:$0xff]
    %v203 = vld [vmem:[%s2 + $0x560] sm:$0xff]
    %v204 = vld [vmem:[%s2 + $0x568] sm:$0xff]
    %v205 = vld [vmem:[%s2 + $0x570] sm:$0xff]
    %v206 = vld [vmem:[%s2 + $0x578] sm:$0xff]
    %v207 = vld [vmem:[%s2 + $0x580] sm:$0xff]
    %v208 = vld [vmem:[%s2 + $0x588] sm:$0xff]
    %v209 = vld [vmem:[%s2 + $0x590] sm:$0xff]
    %v210 = vld [vmem:[%s2 + $0x598] sm:$0xff]
    %v211 = vld [vmem:[%s2 + $0x5a0] sm:$0xff]
    %v212 = vld [vmem:[%s2 + $0x5a8] sm:$0xff]
    %v213 = vld [vmem:[%s2 + $0x5b0] sm:$0xff]
    %v214 = vld [vmem:[%s2 + $0x5b8] sm:$0xff]
    %v215 = vld [vmem:[%s2 + $0x5c0] sm:$0xff]
    %v216 = vld [vmem:[%s2 + $0x5c8] sm:$0xff]
    %v217 = vld [vmem:[%s2 + $0x5d0] sm:$0xff]
    %v218 = vld [vmem:[%s2 + $0x5d8] sm:$0xff]
    %v219 = vld [vmem:[%s2 + $0x5e0] sm:$0xff]
    %v220 = vld [vmem:[%s2 + $0x5e8] sm:$0xff]
    %v221 = vld [vmem:[%s2 + $0x5f0] sm:$0xff]
    %v222 = vld [vmem:[%s2 + $0x5f8] sm:$0xff]
    %v223 = vld [vmem:[%s2 + $0x600] sm:$0xff]
    %v224 = vld [vmem:[%s2 + $0x608] sm:$0xff]
    %v225 = vld [vmem:[%s2 + $0x610] sm:$0xff]
    %v226 = vld [vmem:[%s2 + $0x618] sm:$0xff]
    %v227 = vld [vmem:[%s2 + $0x620] sm:$0xff]
    %v228 = vld [vmem:[%s2 + $0x628] sm:$0xff]
    %v229 = vld [vmem:[%s2 + $0x630] sm:$0xff]
    %v230 = vld [vmem:[%s2 + $0x638] sm:$0xff]
    %v231 = vld [vmem:[%s2 + $0x640] sm:$0xff]
    %v232 = vld [vmem:[%s2 + $0x648] sm:$0xff]
    %v233 = vld [vmem:[%s2 + $0x650] sm:$0xff]
    %v234 = vld [vmem:[%s2 + $0x658] sm:$0xff]
    %v235 = vld [vmem:[%s2 + $0x660] sm:$0xff]
    %v236 = vld [vmem:[%s2 + $0x668] sm:$0xff]
    %v237 = vld [vmem:[%s2 + $0x670] sm:$0xff]
    %v238 = vld [vmem:[%s2 + $0x678] sm:$0xff]
    %v239 = vld [vmem:[%s2 + $0x680] sm:$0xff]
    %v240 = vld [vmem:[%s2 + $0x688] sm:$0xff]
    %v241 = vld [vmem:[%s2 + $0x690] sm:$0xff]
    %v242 = vld [vmem:[%s2 + $0x698] sm:$0xff]
    %v243 = vld [vmem:[%s2 + $0x6a0] sm:$0xff]
    %v244 = vld [vmem:[%s2 + $0x6a8] sm:$0xff]
    %v245 = vld [vmem:[%s2 + $0x6b0] sm:$0xff]
    %v246 = vld [vmem:[%s2 + $0x6b8] sm:$0xff]
    %v247 = vld [vmem:[%s2 + $0x6c0] sm:$0xff]
    %v248 = vld [vmem:[%s2 + $0x6c8] sm:$0xff]
    %v249 = vld [vmem:[%s2 + $0x6d0] sm:$0xff]
    %v250 = vld [vmem:[%s2 + $0x6d8] sm:$0xff]
    %v251 = vld [vmem:[%s2 + $0x6e0] sm:$0xff]
    %v252 = vld [vmem:[%s2 + $0x6e8] sm:$0xff]
    %v253 = vld [vmem:[%s2 + $0x6f0] sm:$0xff]
    %v254 = vld [vmem:[%s2 + $0x6f8] sm:$0xff]
    %v255 = vld [vmem:[%s2 + $0x700] sm:$0xff]
    %v256 = vld [vmem:[%s2 + $0x708] sm:$0xff]
    %v257 = vld [vmem:[%s2 + $0x710] sm:$0xff]
    %v258 = vld [vmem:[%s2 + $0x718] sm:$0xff]
    %v259 = vld [vmem:[%s2 + $0x720] sm:$0xff]
    %v260 = vld [vmem:[%s2 + $0x728] sm:$0xff]
    %v261 = vld [vmem:[%s2 + $0x730] sm:$0xff]
    %v262 = vld [vmem:[%s2 + $0x738] sm:$0xff]
    %v263 = vld [vmem:[%s2 + $0x740] sm:$0xff]
    %v264 = vld [vmem:[%s2 + $0x748] sm:$0xff]
    %v265 = vld [vmem:[%s2 + $0x750] sm:$0xff]
    %v266 = vld [vmem:[%s2 + $0x758] sm:$0xff]
    %v267 = vld [vmem:[%s2 + $0x760] sm:$0xff]
    %v268 = vld [vmem:[%s2 + $0x768] sm:$0xff]
    %v269 = vld [vmem:[%s2 + $0x770] sm:$0xff]
    %v270 = vld [vmem:[%s2 + $0x778] sm:$0xff]
    %v271 = vld [vmem:[%s2 + $0x780] sm:$0xff]
    %v272 = vld [vmem:[%s2 + $0x788] sm:$0xff]
    %v273 = vld [vmem:[%s2 + $0x790] sm:$0xff]
    %v274 = vld [vmem:[%s2 + $0x798] sm:$0xff]
    %v275 = vld [vmem:[%s2 + $0x7a0] sm:$0xff]
    %v276 = vld [vmem:[%s2 + $0x7a8] sm:$0xff]
    %v277 = vld [vmem:[%s2 + $0x7b0] sm:$0xff]
    %v278 = vld [vmem:[%s2 + $0x7b8] sm:$0xff]
    %v279 = vld [vmem:[%s2 + $0x7c0] sm:$0xff]
    %v280 = vld [vmem:[%s2 + $0x7c8] sm:$0xff]
    %v281 = vld [vmem:[%s2 + $0x7d0] sm:$0xff]
    %v282 = vld [vmem:[%s2 + $0x7d8] sm:$0xff]
    %v283 = vld [vmem:[%s2 + $0x7e0] sm:$0xff]
    %v284 = vld [vmem:[%s2 + $0x7e8] sm:$0xff]
    %v285 = vld [vmem:[%s2 + $0x7f0] sm:$0xff]
    %v286 = vld [vmem:[%s2 + $0x7f8] sm:$0xff]
    %v287 = vld [vmem:[%s1] sm:$0x3]
    %v288 = vld [vmem:[%s3] sm:$0xff]
    %v289 = vld [vmem:[%s3 + $0x8] sm:$0xff]
    %v290 = vld [vmem:[%s3 + $0x10] sm:$0xff]
    %v291 = vld [vmem:[%s3 + $0x18] sm:$0xff]
    %vm292 = vcmask 261120
    %v294 = vsel %vm292, %v287, 0
    %296 = vmatpush.msra.mxu0 0.0
    %297 = vmatpush.msra.mxu0 0.0
    %298 = vmatpush.msra.mxu0 0.0
    %299 = vmatpush.msra.mxu0 0.0
    %300 = vmatpush.msra.mxu0 0.0
    %301 = vmatpush.msra.mxu0 0.0
    %302 = vmatpush.msra.mxu0 0.0
    %303 = vmatpush.msra.mxu0 0.0
    %304 = vmatpush.msra.mxu0 0.0
    %305 = vmatpush.msra.mxu0 0.0
    %306 = vmatpush.msra.mxu0 0.0
    %307 = vmatpush.msra.mxu0 0.0
    %308 = vmatpush.msra.mxu0 %v291
    %309 = vmatpush.msra.mxu0 %v290
    %310 = vmatpush.msra.mxu0 %v289
    %311 = vmatpush.msra.mxu0 %v288
    %312 = vmatmul.f32.gmra.mxu0 %v294
    %v313 = vpop.f32.mrf.mxu0
    %v314 = vadd.f32 0.0, %v313
    %315 = vdwg.mxu0
    %320 = vst [vmem:[#allocation1] ss:$4 sm:$0xff] %v27
    %s321 = scalar_lea.vmem [#allocation1], 32
    %322 = vst [vmem:[%s321] ss:$4 sm:$0xff] %v28
    %v323 = vld.sshfl [vmem:[#allocation1] sm:$0xff pattern:$0x73625140]
    %v324 = vld.sshfl [vmem:[#allocation1 + $0x8] sm:$0xff pattern:$0x73625140]
    %v325 = vld.sshfl [vmem:[#allocation1 + $0x10] sm:$0xff pattern:$0x73625140]
    %v326 = vld.sshfl [vmem:[#allocation1 + $0x18] sm:$0xff pattern:$0x73625140]
    %v327 = vld.sshfl [vmem:[#allocation1 + $0x20] sm:$0xff pattern:$0x73625140]
    %v328 = vld.sshfl [vmem:[#allocation1 + $0x28] sm:$0xff pattern:$0x73625140]
    %v329 = vld.sshfl [vmem:[#allocation1 + $0x30] sm:$0xff pattern:$0x73625140]
    %v330 = vld.sshfl [vmem:[#allocation1 + $0x38] sm:$0xff pattern:$0x73625140]
    %331 = vst [vmem:[#allocation1] ss:$4 sm:$0xff] %v29
    %332 = vst [vmem:[%s321] ss:$4 sm:$0xff] %v30
    %v333 = vld.sshfl [vmem:[#allocation1] sm:$0xff pattern:$0x73625140]
    %v334 = vld.sshfl [vmem:[#allocation1 + $0x8] sm:$0xff pattern:$0x73625140]
    %v335 = vld.sshfl [vmem:[#allocation1 + $0x10] sm:$0xff pattern:$0x73625140]
    %v336 = vld.sshfl [vmem:[#allocation1 + $0x18] sm:$0xff pattern:$0x73625140]
    %v337 = vld.sshfl [vmem:[#allocation1 + $0x20] sm:$0xff pattern:$0x73625140]
    %v338 = vld.sshfl [vmem:[#allocation1 + $0x28] sm:$0xff pattern:$0x73625140]
    %v339 = vld.sshfl [vmem:[#allocation1 + $0x30] sm:$0xff pattern:$0x73625140]
    %v340 = vld.sshfl [vmem:[#allocation1 + $0x38] sm:$0xff pattern:$0x73625140]
    %357 = vmatpush.msra.mxu0 %v46
    %358 = vmatpush.msra.mxu0 %v45
    %359 = vmatpush.msra.mxu0 %v44
    %360 = vmatpush.msra.mxu0 %v43
    %361 = vmatpush.msra.mxu0 %v42
    %362 = vmatpush.msra.mxu0 %v41
    %363 = vmatpush.msra.mxu0 %v40
    %364 = vmatpush.msra.mxu0 %v39
    %365 = vmatpush.msra.mxu0 %v38
    %366 = vmatpush.msra.mxu0 %v37
    %367 = vmatpush.msra.mxu0 %v36
    %368 = vmatpush.msra.mxu0 %v35
    %369 = vmatpush.msra.mxu0 %v34
    %370 = vmatpush.msra.mxu0 %v33
    %371 = vmatpush.msra.mxu0 %v32
    %372 = vmatpush.msra.mxu0 %v31
    %373 = vmatmul.f32.gmra.mxu0 %v323
    %v374 = vpop.f32.mrf.mxu0
    %v375 = vadd.f32 %v314, %v374
    %376 = vdwg.mxu0
    %377 = vmatpush.msra.mxu0 %v62
    %378 = vmatpush.msra.mxu0 %v61
    %379 = vmatpush.msra.mxu0 %v60
    %380 = vmatpush.msra.mxu0 %v59
    %381 = vmatpush.msra.mxu0 %v58
    %382 = vmatpush.msra.mxu0 %v57
    %383 = vmatpush.msra.mxu0 %v56
    %384 = vmatpush.msra.mxu0 %v55
    %385 = vmatpush.msra.mxu0 %v54
    %386 = vmatpush.msra.mxu0 %v53
    %387 = vmatpush.msra.mxu0 %v52
    %388 = vmatpush.msra.mxu0 %v51
    %389 = vmatpush.msra.mxu0 %v50
    %390 = vmatpush.msra.mxu0 %v49
    %391 = vmatpush.msra.mxu0 %v48
    %392 = vmatpush.msra.mxu0 %v47
    %393 = vmatmul.f32.gmra.mxu0 %v324
    %v394 = vpop.f32.mrf.mxu0
    %v395 = vadd.f32 %v375, %v394
    %396 = vdwg.mxu0
    %397 = vmatpush.msra.mxu0 %v78
    %398 = vmatpush.msra.mxu0 %v77
    %399 = vmatpush.msra.mxu0 %v76
    %400 = vmatpush.msra.mxu0 %v75
    %401 = vmatpush.msra.mxu0 %v74
    %402 = vmatpush.msra.mxu0 %v73
    %403 = vmatpush.msra.mxu0 %v72
    %404 = vmatpush.msra.mxu0 %v71
    %405 = vmatpush.msra.mxu0 %v70
    %406 = vmatpush.msra.mxu0 %v69
    %407 = vmatpush.msra.mxu0 %v68
    %408 = vmatpush.msra.mxu0 %v67
    %409 = vmatpush.msra.mxu0 %v66
    %410 = vmatpush.msra.mxu0 %v65
    %411 = vmatpush.msra.mxu0 %v64
    %412 = vmatpush.msra.mxu0 %v63
    %413 = vmatmul.f32.gmra.mxu0 %v325
    %v414 = vpop.f32.mrf.mxu0
    %v415 = vadd.f32 %v395, %v414
    %416 = vdwg.mxu0
    %417 = vmatpush.msra.mxu0 %v94
    %418 = vmatpush.msra.mxu0 %v93
    %419 = vmatpush.msra.mxu0 %v92
    %420 = vmatpush.msra.mxu0 %v91
    %421 = vmatpush.msra.mxu0 %v90
    %422 = vmatpush.msra.mxu0 %v89
    %423 = vmatpush.msra.mxu0 %v88
    %424 = vmatpush.msra.mxu0 %v87
    %425 = vmatpush.msra.mxu0 %v86
    %426 = vmatpush.msra.mxu0 %v85
    %427 = vmatpush.msra.mxu0 %v84
    %428 = vmatpush.msra.mxu0 %v83
    %429 = vmatpush.msra.mxu0 %v82
    %430 = vmatpush.msra.mxu0 %v81
    %431 = vmatpush.msra.mxu0 %v80
    %432 = vmatpush.msra.mxu0 %v79
    %433 = vmatmul.f32.gmra.mxu0 %v326
    %v434 = vpop.f32.mrf.mxu0
    %v435 = vadd.f32 %v415, %v434
    %436 = vdwg.mxu0
    %437 = vmatpush.msra.mxu0 %v110
    %438 = vmatpush.msra.mxu0 %v109
    %439 = vmatpush.msra.mxu0 %v108
    %440 = vmatpush.msra.mxu0 %v107
    %441 = vmatpush.msra.mxu0 %v106
    %442 = vmatpush.msra.mxu0 %v105
    %443 = vmatpush.msra.mxu0 %v104
    %444 = vmatpush.msra.mxu0 %v103
    %445 = vmatpush.msra.mxu0 %v102
    %446 = vmatpush.msra.mxu0 %v101
    %447 = vmatpush.msra.mxu0 %v100
    %448 = vmatpush.msra.mxu0 %v99
    %449 = vmatpush.msra.mxu0 %v98
    %450 = vmatpush.msra.mxu0 %v97
    %451 = vmatpush.msra.mxu0 %v96
    %452 = vmatpush.msra.mxu0 %v95
    %453 = vmatmul.f32.gmra.mxu0 %v327
    %v454 = vpop.f32.mrf.mxu0
    %v455 = vadd.f32 %v435, %v454
    %456 = vdwg.mxu0
    %457 = vmatpush.msra.mxu0 %v126
    %458 = vmatpush.msra.mxu0 %v125
    %459 = vmatpush.msra.mxu0 %v124
    %460 = vmatpush.msra.mxu0 %v123
    %461 = vmatpush.msra.mxu0 %v122
    %462 = vmatpush.msra.mxu0 %v121
    %463 = vmatpush.msra.mxu0 %v120
    %464 = vmatpush.msra.mxu0 %v119
    %465 = vmatpush.msra.mxu0 %v118
    %466 = vmatpush.msra.mxu0 %v117
    %467 = vmatpush.msra.mxu0 %v116
    %468 = vmatpush.msra.mxu0 %v115
    %469 = vmatpush.msra.mxu0 %v114
    %470 = vmatpush.msra.mxu0 %v113
    %471 = vmatpush.msra.mxu0 %v112
    %472 = vmatpush.msra.mxu0 %v111
    %473 = vmatmul.f32.gmra.mxu0 %v328
    %v474 = vpop.f32.mrf.mxu0
    %v475 = vadd.f32 %v455, %v474
    %476 = vdwg.mxu0
    %477 = vmatpush.msra.mxu0 %v142
    %478 = vmatpush.msra.mxu0 %v141
    %479 = vmatpush.msra.mxu0 %v140
    %480 = vmatpush.msra.mxu0 %v139
    %481 = vmatpush.msra.mxu0 %v138
    %482 = vmatpush.msra.mxu0 %v137
    %483 = vmatpush.msra.mxu0 %v136
    %484 = vmatpush.msra.mxu0 %v135
    %485 = vmatpush.msra.mxu0 %v134
    %486 = vmatpush.msra.mxu0 %v133
    %487 = vmatpush.msra.mxu0 %v132
    %488 = vmatpush.msra.mxu0 %v131
    %489 = vmatpush.msra.mxu0 %v130
    %490 = vmatpush.msra.mxu0 %v129
    %491 = vmatpush.msra.mxu0 %v128
    %492 = vmatpush.msra.mxu0 %v127
    %493 = vmatmul.f32.gmra.mxu0 %v329
    %v494 = vpop.f32.mrf.mxu0
    %v495 = vadd.f32 %v475, %v494
    %496 = vdwg.mxu0
    %497 = vmatpush.msra.mxu0 %v158
    %498 = vmatpush.msra.mxu0 %v157
    %499 = vmatpush.msra.mxu0 %v156
    %500 = vmatpush.msra.mxu0 %v155
    %501 = vmatpush.msra.mxu0 %v154
    %502 = vmatpush.msra.mxu0 %v153
    %503 = vmatpush.msra.mxu0 %v152
    %504 = vmatpush.msra.mxu0 %v151
    %505 = vmatpush.msra.mxu0 %v150
    %506 = vmatpush.msra.mxu0 %v149
    %507 = vmatpush.msra.mxu0 %v148
    %508 = vmatpush.msra.mxu0 %v147
    %509 = vmatpush.msra.mxu0 %v146
    %510 = vmatpush.msra.mxu0 %v145
    %511 = vmatpush.msra.mxu0 %v144
    %512 = vmatpush.msra.mxu0 %v143
    %513 = vmatmul.f32.gmra.mxu0 %v330
    %v514 = vpop.f32.mrf.mxu0
    %v515 = vadd.f32 %v495, %v514
    %516 = vdwg.mxu0
    %517 = vmatpush.msra.mxu0 %v174
    %518 = vmatpush.msra.mxu0 %v173
    %519 = vmatpush.msra.mxu0 %v172
    %520 = vmatpush.msra.mxu0 %v171
    %521 = vmatpush.msra.mxu0 %v170
    %522 = vmatpush.msra.mxu0 %v169
    %523 = vmatpush.msra.mxu0 %v168
    %524 = vmatpush.msra.mxu0 %v167
    %525 = vmatpush.msra.mxu0 %v166
    %526 = vmatpush.msra.mxu0 %v165
    %527 = vmatpush.msra.mxu0 %v164
    %528 = vmatpush.msra.mxu0 %v163
    %529 = vmatpush.msra.mxu0 %v162
    %530 = vmatpush.msra.mxu0 %v161
    %531 = vmatpush.msra.mxu0 %v160
    %532 = vmatpush.msra.mxu0 %v159
    %533 = vmatmul.f32.gmra.mxu0 %v333
    %v534 = vpop.f32.mrf.mxu0
    %v535 = vadd.f32 %v515, %v534
    %536 = vdwg.mxu0
    %537 = vmatpush.msra.mxu0 %v190
    %538 = vmatpush.msra.mxu0 %v189
    %539 = vmatpush.msra.mxu0 %v188
    %540 = vmatpush.msra.mxu0 %v187
    %541 = vmatpush.msra.mxu0 %v186
    %542 = vmatpush.msra.mxu0 %v185
    %543 = vmatpush.msra.mxu0 %v184
    %544 = vmatpush.msra.mxu0 %v183
    %545 = vmatpush.msra.mxu0 %v182
    %546 = vmatpush.msra.mxu0 %v181
    %547 = vmatpush.msra.mxu0 %v180
    %548 = vmatpush.msra.mxu0 %v179
    %549 = vmatpush.msra.mxu0 %v178
    %550 = vmatpush.msra.mxu0 %v177
    %551 = vmatpush.msra.mxu0 %v176
    %552 = vmatpush.msra.mxu0 %v175
    %553 = vmatmul.f32.gmra.mxu0 %v334
    %v554 = vpop.f32.mrf.mxu0
    %v555 = vadd.f32 %v535, %v554
    %556 = vdwg.mxu0
    %557 = vmatpush.msra.mxu0 %v206
    %558 = vmatpush.msra.mxu0 %v205
    %559 = vmatpush.msra.mxu0 %v204
    %560 = vmatpush.msra.mxu0 %v203
    %561 = vmatpush.msra.mxu0 %v202
    %562 = vmatpush.msra.mxu0 %v201
    %563 = vmatpush.msra.mxu0 %v200
    %564 = vmatpush.msra.mxu0 %v199
    %565 = vmatpush.msra.mxu0 %v198
    %566 = vmatpush.msra.mxu0 %v197
    %567 = vmatpush.msra.mxu0 %v196
    %568 = vmatpush.msra.mxu0 %v195
    %569 = vmatpush.msra.mxu0 %v194
    %570 = vmatpush.msra.mxu0 %v193
    %571 = vmatpush.msra.mxu0 %v192
    %572 = vmatpush.msra.mxu0 %v191
    %573 = vmatmul.f32.gmra.mxu0 %v335
    %v574 = vpop.f32.mrf.mxu0
    %v575 = vadd.f32 %v555, %v574
    %576 = vdwg.mxu0
    %577 = vmatpush.msra.mxu0 %v222
    %578 = vmatpush.msra.mxu0 %v221
    %579 = vmatpush.msra.mxu0 %v220
    %580 = vmatpush.msra.mxu0 %v219
    %581 = vmatpush.msra.mxu0 %v218
    %582 = vmatpush.msra.mxu0 %v217
    %583 = vmatpush.msra.mxu0 %v216
    %584 = vmatpush.msra.mxu0 %v215
    %585 = vmatpush.msra.mxu0 %v214
    %586 = vmatpush.msra.mxu0 %v213
    %587 = vmatpush.msra.mxu0 %v212
    %588 = vmatpush.msra.mxu0 %v211
    %589 = vmatpush.msra.mxu0 %v210
    %590 = vmatpush.msra.mxu0 %v209
    %591 = vmatpush.msra.mxu0 %v208
    %592 = vmatpush.msra.mxu0 %v207
    %593 = vmatmul.f32.gmra.mxu0 %v336
    %v594 = vpop.f32.mrf.mxu0
    %v595 = vadd.f32 %v575, %v594
    %596 = vdwg.mxu0
    %597 = vmatpush.msra.mxu0 %v238
    %598 = vmatpush.msra.mxu0 %v237
    %599 = vmatpush.msra.mxu0 %v236
    %600 = vmatpush.msra.mxu0 %v235
    %601 = vmatpush.msra.mxu0 %v234
    %602 = vmatpush.msra.mxu0 %v233
    %603 = vmatpush.msra.mxu0 %v232
    %604 = vmatpush.msra.mxu0 %v231
    %605 = vmatpush.msra.mxu0 %v230
    %606 = vmatpush.msra.mxu0 %v229
    %607 = vmatpush.msra.mxu0 %v228
    %608 = vmatpush.msra.mxu0 %v227
    %609 = vmatpush.msra.mxu0 %v226
    %610 = vmatpush.msra.mxu0 %v225
    %611 = vmatpush.msra.mxu0 %v224
    %612 = vmatpush.msra.mxu0 %v223
    %613 = vmatmul.f32.gmra.mxu0 %v337
    %v614 = vpop.f32.mrf.mxu0
    %v615 = vadd.f32 %v595, %v614
    %616 = vdwg.mxu0
    %617 = vmatpush.msra.mxu0 %v254
    %618 = vmatpush.msra.mxu0 %v253
    %619 = vmatpush.msra.mxu0 %v252
    %620 = vmatpush.msra.mxu0 %v251
    %621 = vmatpush.msra.mxu0 %v250
    %622 = vmatpush.msra.mxu0 %v249
    %623 = vmatpush.msra.mxu0 %v248
    %624 = vmatpush.msra.mxu0 %v247
    %625 = vmatpush.msra.mxu0 %v246
    %626 = vmatpush.msra.mxu0 %v245
    %627 = vmatpush.msra.mxu0 %v244
    %628 = vmatpush.msra.mxu0 %v243
    %629 = vmatpush.msra.mxu0 %v242
    %630 = vmatpush.msra.mxu0 %v241
    %631 = vmatpush.msra.mxu0 %v240
    %632 = vmatpush.msra.mxu0 %v239
    %633 = vmatmul.f32.gmra.mxu0 %v338
    %v634 = vpop.f32.mrf.mxu0
    %v635 = vadd.f32 %v615, %v634
    %636 = vdwg.mxu0
    %637 = vmatpush.msra.mxu0 %v270
    %638 = vmatpush.msra.mxu0 %v269
    %639 = vmatpush.msra.mxu0 %v268
    %640 = vmatpush.msra.mxu0 %v267
    %641 = vmatpush.msra.mxu0 %v266
    %642 = vmatpush.msra.mxu0 %v265
    %643 = vmatpush.msra.mxu0 %v264
    %644 = vmatpush.msra.mxu0 %v263
    %645 = vmatpush.msra.mxu0 %v262
    %646 = vmatpush.msra.mxu0 %v261
    %647 = vmatpush.msra.mxu0 %v260
    %648 = vmatpush.msra.mxu0 %v259
    %649 = vmatpush.msra.mxu0 %v258
    %650 = vmatpush.msra.mxu0 %v257
    %651 = vmatpush.msra.mxu0 %v256
    %652 = vmatpush.msra.mxu0 %v255
    %653 = vmatmul.f32.gmra.mxu0 %v339
    %v654 = vpop.f32.mrf.mxu0
    %v655 = vadd.f32 %v635, %v654
    %656 = vdwg.mxu0
    %657 = vmatpush.msra.mxu0 %v286
    %658 = vmatpush.msra.mxu0 %v285
    %659 = vmatpush.msra.mxu0 %v284
    %660 = vmatpush.msra.mxu0 %v283
    %661 = vmatpush.msra.mxu0 %v282
    %662 = vmatpush.msra.mxu0 %v281
    %663 = vmatpush.msra.mxu0 %v280
    %664 = vmatpush.msra.mxu0 %v279
    %665 = vmatpush.msra.mxu0 %v278
    %666 = vmatpush.msra.mxu0 %v277
    %667 = vmatpush.msra.mxu0 %v276
    %668 = vmatpush.msra.mxu0 %v275
    %669 = vmatpush.msra.mxu0 %v274
    %670 = vmatpush.msra.mxu0 %v273
    %671 = vmatpush.msra.mxu0 %v272
    %672 = vmatpush.msra.mxu0 %v271
    %673 = vmatmul.f32.gmra.mxu0 %v340
    %v674 = vpop.f32.mrf.mxu0
    %v675 = vadd.f32 %v655, %v674
    %676 = vdwg.mxu0
    %v677 = vld [vmem:[%s4] sm:$0x1]
    %v679 = vperm.slane %v677, 0
    %v681 = vadd.f32 %v675, %v679
    %v682 = vmax.f32 %v681, 0.0
    %v683 = vld [vmem:[%s5] sm:$0xff]
    %v684 = vld [vmem:[%s5 + $0x8] sm:$0xff]
    %v685 = vld [vmem:[%s5 + $0x10] sm:$0xff]
    %v686 = vld [vmem:[%s5 + $0x18] sm:$0xff]
    %v687 = vld [vmem:[%s6] sm:$0x1]
    %v689 = vperm.slane %v687, 0
    %v692 = vsel %vm292, %v682, 0
    %694 = vmatpush.msra.mxu0 0.0
    %695 = vmatpush.msra.mxu0 0.0
    %696 = vmatpush.msra.mxu0 0.0
    %697 = vmatpush.msra.mxu0 0.0
    %698 = vmatpush.msra.mxu0 0.0
    %699 = vmatpush.msra.mxu0 0.0
    %700 = vmatpush.msra.mxu0 0.0
    %701 = vmatpush.msra.mxu0 0.0
    %702 = vmatpush.msra.mxu0 0.0
    %703 = vmatpush.msra.mxu0 0.0
    %704 = vmatpush.msra.mxu0 0.0
    %705 = vmatpush.msra.mxu0 0.0
    %706 = vmatpush.msra.mxu0 %v686
    %707 = vmatpush.msra.mxu0 %v685
    %708 = vmatpush.msra.mxu0 %v684
    %709 = vmatpush.msra.mxu0 %v683
    %710 = vmatmul.f32.gmra.mxu0 %v692
    %v711 = vpop.f32.mrf.mxu0
    %v712 = vadd.f32 %v689, %v711
    %713 = vdwg.mxu0
    %vm714 = vcmask 58368
    %715 = vst.msk [vmem:[#allocation2] sm:$0x3] %vm714, %v712
    // Predicated region
    $region30: #{_lambda_.7} parent=1 // pred_check
      _
    $region31: #{_lambda_.7} parent=1 // pred_check_branch
      %717 = sbr.rel (0) target = $region33
    $region32: #{_lambda_.7} parent=1 // pred_region
      %719 = vsyncadd [#allocation3], 0
      %s721 = sshll.u32 [#allocation2], 4
      %s722 = int_to_ptr.vmem [resolvable:$true] %s721
      %s723 = sshll.u32 %s7, 4
      %s724 = int_to_ptr.hbm [resolvable:$true] %s723
      %726 = dma.vmem_to_hbm [thread:$0]  %s722, 32, %s724, [#allocation3]
    $region33: #{_lambda_.7} parent=1 // pred_fallthru
      _
    // Predicated region
    $region34: #{_lambda_.7} parent=1 // pred_check
      _
    $region35: #{_lambda_.7} parent=1 // pred_check_branch
      %728 = sbr.rel (0) target = $region37
    $region36: #{_lambda_.7} parent=1 // pred_region
      %730 = dma.done [#allocation3], 32
    $region37: #{_lambda_.7} parent=1 // pred_fallthru
      _
    %731 = vsyncpa [#allocation3], 1

</llo_original>
